<compile_context>
chip_gen: v7x
topology: tpu7x:2x2x1
jax: 0.10.0
libtpu: 0.0.40
codegen_flags: <defaults>
</compile_context>

<pallas_src>
import jax
import jax.numpy as jnp
from jax import lax
from jax.experimental import pallas as pl
from jax.experimental.pallas import tpu as pltpu

TAU = 2.0
V_TH = 1.0


def _round_up(x, m):
    return (x + m - 1) // m * m


def _cdiv(a, b):
    return -(-a // b)


def _vmem_capacity_bytes():
    """Physical VMEM of the current chip; conservative 64 MiB (v7x) fallback."""
    try:
        info = pltpu.get_tpu_info()
        for name in ("vmem_capacity_bytes", "vmem_bytes", "vmem_size_bytes"):
            cap = getattr(info, name, None)
            if cap:
                return int(cap)
    except Exception:
        pass
    return 64 * 1024 * 1024


def _plan_tiles(N, T, Cp, Hp):
    """Pick token-tile size TN (sublane-aligned), padded N, and a VMEM limit.

    Sized so the double-buffered (T, TN, Cp) x/out blocks + resident bf16
    weights + in-kernel f32 temporaries (v1, v2, h, o) and bf16 spikes stay
    under ~60% of this generation's VMEM, with >= 2 tiles whenever possible
    (both v7x TensorCores busy) and minimal N-padding waste.
    """
    cap = _vmem_capacity_bytes()
    budget = int(0.60 * cap)

    # Grid-invariant residents: bf16 scale-folded weights + f32 shift rows.
    fixed = 2 * Cp * Hp * 2 + (Cp + Hp) * 4
    # Bytes per token row:
    #   x + out blocks: 2 arrays * 2 pipeline buffers * T steps * Cp * 4B
    #   f32 temps (v1/o on Cp, v2/h on Hp) + bf16 spikes (Cp + Hp)
    per_row = 2 * 2 * T * Cp * 4 + 2 * (Cp + Hp) * 4 + (Cp + Hp) * 2

    tn_cap = (budget - fixed) // per_row
    tn_cap = max(8, min(1024, (tn_cap // 8) * 8))

    n8 = _round_up(max(N, 1), 8)
    want_tiles = 2 if n8 > 8 else 1          # >= 2 tiles -> both v7x TCs busy
    tiles = max(want_tiles, _cdiv(n8, tn_cap))
    tn = min(tn_cap, _round_up(_cdiv(n8, tiles), 8))
    tiles = _cdiv(n8, tn)
    n_pad = tiles * tn

    est = fixed + per_row * tn
    vmem_limit = int(min(int(0.9 * cap), max(2 * est, 32 * 1024 * 1024)))
    return tn, n_pad, tiles, vmem_limit


def _mlp_kernel(x_ref, w1_ref, sh1_ref, w2_ref, sh2_ref, out_ref):
    """One N tile: runs all T timesteps, membrane potentials as loop carries.

    x_ref/out_ref: (T, TN, Cp); w1: (Cp, Hp); sh1: (1, Hp); w2: (Hp, Cp); sh2: (1, Cp)
    """
    T, TN, Cp = x_ref.shape
    Hp = w1_ref.shape[1]

    w1 = w1_ref[...]
    w2 = w2_ref[...]
    sh1 = sh1_ref[...]
    sh2 = sh2_ref[...]
    inv_tau = jnp.float32(1.0 / TAU)

    def step(t, carry):
        v1, v2 = carry
        x = x_ref[t].astype(jnp.float32)                      # (TN, Cp)

        # ---- LIF 1 (tau=2, decay_input=True, v_reset=0, hard reset) ----
        v1 = v1 + (x - v1) * inv_tau
        spk1 = v1 >= V_TH                                     # single compare, reused
        v1 = jnp.where(spk1, 0.0, v1)
        s1 = spk1.astype(jnp.bfloat16)                        # spikes exact in bf16

        # ---- 1x1 conv (C -> hidden), BN scale folded into w1; shift here ----
        h = jnp.dot(s1, w1, preferred_element_type=jnp.float32) + sh1

        # ---- LIF 2 ----
        v2 = v2 + (h - v2) * inv_tau
        spk2 = v2 >= V_TH
        v2 = jnp.where(spk2, 0.0, v2)
        s2 = spk2.astype(jnp.bfloat16)

        # ---- 1x1 conv (hidden -> C), BN scale folded into w2; shift here ----
        o = jnp.dot(s2, w2, preferred_element_type=jnp.float32) + sh2
        out_ref[t] = o.astype(out_ref.dtype)
        return v1, v2

    v1_0 = jnp.zeros((TN, Cp), jnp.float32)
    v2_0 = jnp.zeros((TN, Hp), jnp.float32)
    lax.fori_loop(0, T, step, (v1_0, v2_0), unroll=True)


def _const_spec(shape, single_buffer):
    """BlockSpec for a grid-invariant operand; single-buffered when supported."""
    idx = lambda n: (0,) * len(shape)
    if single_buffer:
        try:
            return pl.BlockSpec(shape, idx, pipeline_mode=pl.Buffered(1))
        except TypeError:
            pass
    return pl.BlockSpec(shape, idx)


def _build_call(T, n_pad, tn, Cp, Hp, out_dtype, vmem_limit, single_buffer_weights):
    n_tiles = n_pad // tn
    return pl.pallas_call(
        _mlp_kernel,
        out_shape=jax.ShapeDtypeStruct((T, n_pad, Cp), out_dtype),
        grid_spec=pltpu.PrefetchScalarGridSpec(
            num_scalar_prefetch=0,
            grid=(n_tiles,),                                         # N tiles only; T inside
            in_specs=[
                pl.BlockSpec((T, tn, Cp), lambda n: (0, n, 0)),      # x tokens
                _const_spec((Cp, Hp), single_buffer_weights),        # w1 (scale-folded, bf16)
                _const_spec((1, Hp), single_buffer_weights),         # shift1
                _const_spec((Hp, Cp), single_buffer_weights),        # w2 (scale-folded, bf16)
                _const_spec((1, Cp), single_buffer_weights),         # shift2
            ],
            out_specs=pl.BlockSpec((T, tn, Cp), lambda n: (0, n, 0)),
        ),
        compiler_params=pltpu.CompilerParams(
            dimension_semantics=("parallel",),                       # whole grid is parallel
            vmem_limit_bytes=vmem_limit,
        ),
    )


def mlp_forward_tokens(x_tok, alpha, params):
    """Channels-last token form: x_tok (T, N, C) -> (T, N, C).

    Callers that already hold channels-last activations should use this entry
    point and skip the NCHW transposes in `mlp_forward`.  `alpha` only affects
    STHLIFNode's surrogate gradient (backward), so it is accepted but unused.
    """
    del alpha
    T, N, C = x_tok.shape
    w1, sc1, sh1, w2, sc2, sh2 = params
    hidden = w1.shape[1]
    assert w1.shape[0] == C and w2.shape == (hidden, C)

    Cp = _round_up(C, 128)
    Hp = _round_up(hidden, 128)
    tn, n_pad, _, vmem_limit = _plan_tiles(N, T, Cp, Hp)

    # Fold BN scale into the conv weights, cast to bf16, zero-pad to lane tiles.
    w1f = jnp.pad((w1 * sc1).astype(jnp.bfloat16), ((0, Cp - C), (0, Hp - hidden)))
    w2f = jnp.pad((w2 * sc2).astype(jnp.bfloat16), ((0, Hp - hidden), (0, Cp - C)))
    sh1p = jnp.pad(sh1.reshape(1, hidden).astype(jnp.float32), ((0, 0), (0, Hp - hidden)))
    sh2p = jnp.pad(sh2.reshape(1, C).astype(jnp.float32), ((0, 0), (0, Cp - C)))

    # Zero-pad tokens/channels in one op (no-op when C % 128 == 0 and N % tn == 0).
    xp = x_tok
    if n_pad != N or Cp != C:
        xp = jnp.pad(x_tok, ((0, 0), (0, n_pad - N), (0, Cp - C)))

    args = (xp, w1f, sh1p, w2f, sh2p)
    try:
        out_tok = _build_call(T, n_pad, tn, Cp, Hp, x_tok.dtype, vmem_limit, True)(*args)
    except Exception:
        # pipeline_mode=pl.Buffered(1) not supported on this jax build: retry default.
        out_tok = _build_call(T, n_pad, tn, Cp, Hp, x_tok.dtype, vmem_limit, False)(*args)

    if n_pad != N or Cp != C:
        out_tok = out_tok[:, :N, :C]   # padded rows/cols are garbage/zero; never alias back
    return out_tok


def mlp_forward(x, alpha, params):
    """x: (T, B, C, H, W) float32 -> (T, B, C, H, W); matches MLP.forward.

    The two transposes here are the only wrapper-side HBM passes left; a
    channels-last-native caller should use `mlp_forward_tokens` directly.
    """
    T, B, C, H, W = x.shape
    N = B * H * W
    x_tok = jnp.transpose(x, (0, 1, 3, 4, 2)).reshape(T, N, C)
    out_tok = mlp_forward_tokens(x_tok, alpha, params)
    return jnp.transpose(out_tok.reshape(T, B, H, W, C), (0, 1, 4, 2, 3))


def _mlp_reference(x_tok, params):
    """Pure-JAX reference mirroring the kernel (same bf16 weight folding)."""
    T, N, C = x_tok.shape
    w1, sc1, sh1, w2, sc2, sh2 = params
    hidden = w1.shape[1]
    w1f = (w1 * sc1).astype(jnp.bfloat16)
    w2f = (w2 * sc2).astype(jnp.bfloat16)

    def lif(x_seq, v):
        outs = []
        for t in range(x_seq.shape[0]):
            v = v + (x_seq[t] - v) / TAU
            s = v >= V_TH
            v = jnp.where(s, 0.0, v)
            outs.append(s.astype(jnp.bfloat16))
        return jnp.stack(outs)

    s1 = lif(x_tok.astype(jnp.float32), jnp.zeros((N, C), jnp.float32))
    h = jnp.einsum("tnc,ch->tnh", s1, w1f,
                   preferred_element_type=jnp.float32) + sh1.reshape(1, 1, hidden)
    s2 = lif(h, jnp.zeros((N, hidden), jnp.float32))
    o = jnp.einsum("tnh,hc->tnc", s2, w2f,
                   preferred_element_type=jnp.float32) + sh2.reshape(1, 1, C)
    return o.astype(x_tok.dtype)


def make_params(key, in_features, hidden_features, eps=1e-5):
    """Deterministic synthetic parameters (conv bias + eval-mode BN -> scale/shift)."""
    out_features = in_features
    ks = jax.random.split(key, 12)   # distinct keys per layer (no reuse)

    def conv_bn(kw, kb, kg, kbe, km, kv, cin, cout):
        # PyTorch Conv2d(cin, cout, 1) weight is (cout, cin, 1, 1); stored here as (cin, cout).
        w = jax.random.normal(kw, (cin, cout), jnp.float32) * (1.0 / jnp.sqrt(cin))
        b = jax.random.normal(kb, (cout,), jnp.float32) * 0.1
        gamma = 1.0 + 0.1 * jax.random.normal(kg, (cout,), jnp.float32)
        beta = 0.1 * jax.random.normal(kbe, (cout,), jnp.float32)
        rmean = 0.1 * jax.random.normal(km, (cout,), jnp.float32)
        rvar = 1.0 + 0.1 * jax.random.uniform(kv, (cout,), jnp.float32)
        scale = gamma / jnp.sqrt(rvar + eps)                 # BN eval-mode fold
        shift = beta + scale * (b - rmean)
        return w, scale.reshape(1, cout), shift.reshape(1, cout)

    w1, sc1, sh1 = conv_bn(*ks[0:6], in_features, hidden_features)
    w2, sc2, sh2 = conv_bn(*ks[6:12], hidden_features, out_features)
    return (w1, sc1, sh1, w2, sc2, sh2)


if __name__ == "__main__":
    key = jax.random.PRNGKey(0)
    k_x, k_p = jax.random.split(key)

    # Small shapes consistent with the module's forward: (T, B, C, H, W),
    # hidden = dim * mlp_ratio (4).
    T, B, C, H, W = 2, 2, 16, 8, 8
    hidden = 4 * C

    x = jax.random.normal(k_x, (T, B, C, H, W), jnp.float32) * 2.0
    alpha = jnp.float32(2.0)
    params = make_params(k_p, C, hidden)

    out = mlp_forward(x, alpha, params)
    out = jax.block_until_ready(out)
    assert out.shape == (T, B, C, H, W), out.shape
    assert bool(jnp.all(jnp.isfinite(out)))

    # Sanity check against a pure-JAX reference (loose mean-abs tolerance: a
    # borderline membrane value can flip a spike under a different f32
    # accumulation order, which is not a kernel bug).
    x_tok = jnp.transpose(x, (0, 1, 3, 4, 2)).reshape(T, B * H * W, C)
    ref = jnp.transpose(_mlp_reference(x_tok, params).reshape(T, B, H, W, C),
                        (0, 1, 4, 2, 3))
    assert float(jnp.mean(jnp.abs(out - ref))) < 2e-2

    print("KERNEL_OK")
</pallas_src>

<mosaic_0001>
module attributes {stable_mosaic.version = 11 : i64} {
  func.func @_mlp_kernel(%arg0: i32, %arg1: memref<2x64x128xf32, #tpu.memory_space<vmem>>, %arg2: memref<128x128xbf16, #tpu.memory_space<vmem>>, %arg3: memref<1x128xf32, #tpu.memory_space<vmem>>, %arg4: memref<128x128xbf16, #tpu.memory_space<vmem>>, %arg5: memref<1x128xf32, #tpu.memory_space<vmem>>, %arg6: memref<2x64x128xf32, #tpu.memory_space<vmem>>) attributes {dimension_semantics = [#tpu.dimension_semantics<parallel>], iteration_bounds = array<i64: 2>, scalar_prefetch = 0 : i64, scratch_operands = 0 : i64, tpu.core_type = #tpu.core_type<tc>, window_params = [{transform_indices = @transform_0, window_bounds = array<i64: 2, 64, 128>}, {pipeline_mode = #tpu.pipeline_mode<synchronous>, transform_indices = @transform_1, window_bounds = array<i64: 128, 128>}, {pipeline_mode = #tpu.pipeline_mode<synchronous>, transform_indices = @transform_2, window_bounds = array<i64: 1, 128>}, {pipeline_mode = #tpu.pipeline_mode<synchronous>, transform_indices = @transform_3, window_bounds = array<i64: 128, 128>}, {pipeline_mode = #tpu.pipeline_mode<synchronous>, transform_indices = @transform_4, window_bounds = array<i64: 1, 128>}, {transform_indices = @transform_5, window_bounds = array<i64: 2, 64, 128>}]} {
    %c0 = arith.constant 0 : index
    %c0_0 = arith.constant 0 : index
    %0 = vector.load %arg2[%c0, %c0_0] : memref<128x128xbf16, #tpu.memory_space<vmem>>, vector<128x128xbf16>
    %c0_1 = arith.constant 0 : index
    %c0_2 = arith.constant 0 : index
    %1 = vector.load %arg4[%c0_1, %c0_2] : memref<128x128xbf16, #tpu.memory_space<vmem>>, vector<128x128xbf16>
    %c0_3 = arith.constant 0 : index
    %c0_4 = arith.constant 0 : index
    %2 = vector.load %arg3[%c0_3, %c0_4] : memref<1x128xf32, #tpu.memory_space<vmem>>, vector<1x128xf32>
    %c0_5 = arith.constant 0 : index
    %c0_6 = arith.constant 0 : index
    %3 = vector.load %arg5[%c0_5, %c0_6] : memref<1x128xf32, #tpu.memory_space<vmem>>, vector<1x128xf32>
    %cst = arith.constant 0.000000e+00 : f32
    %4 = vector.broadcast %cst : f32 to vector<64x128xf32>
    %cst_7 = arith.constant 0.000000e+00 : f32
    %5 = vector.broadcast %cst_7 : f32 to vector<64x128xf32>
    %cst_8 = arith.constant 5.000000e-01 : f32
    %c0_i32 = arith.constant 0 : i32
    %6 = arith.index_cast %c0_i32 : i32 to index
    %c0_9 = arith.constant 0 : index
    %c0_10 = arith.constant 0 : index
    %7 = vector.load %arg1[%6, %c0_9, %c0_10] : memref<2x64x128xf32, #tpu.memory_space<vmem>>, vector<1x64x128xf32>
    %8 = vector.shape_cast %7 : vector<1x64x128xf32> to vector<64x128xf32>
    %9 = arith.subf %8, %4 : vector<64x128xf32>
    %10 = vector.broadcast %cst_8 : f32 to vector<64x128xf32>
    %11 = arith.mulf %9, %10 : vector<64x128xf32>
    %12 = arith.addf %4, %11 : vector<64x128xf32>
    %cst_11 = arith.constant 1.000000e+00 : f32
    %13 = vector.broadcast %cst_11 : f32 to vector<64x128xf32>
    %14 = arith.cmpf oge, %12, %13 : vector<64x128xf32>
    %cst_12 = arith.constant 0.000000e+00 : f32
    %15 = vector.broadcast %cst_12 : f32 to vector<64x128xf32>
    %16 = arith.select %14, %15, %12 : vector<64x128xi1>, vector<64x128xf32>
    %17 = arith.extui %14 : vector<64x128xi1> to vector<64x128xi32>
    %18 = arith.sitofp %17 : vector<64x128xi32> to vector<64x128xf32>
    %19 = arith.truncf %18 : vector<64x128xf32> to vector<64x128xbf16>
    %cst_13 = arith.constant dense<0.000000e+00> : vector<64x128xf32>
    %20 = tpu.matmul %19, %0, %cst_13 {dimension_numbers = #tpu.dot_dimension_numbers<[1], [0], [0], [1], [0, 0, 1, 1], [], []>} : vector<64x128xbf16>, vector<128x128xbf16>, vector<64x128xf32> -> vector<64x128xf32>
    %21 = vector.broadcast %2 : vector<1x128xf32> to vector<64x128xf32>
    %22 = arith.addf %20, %21 : vector<64x128xf32>
    %23 = arith.subf %22, %5 : vector<64x128xf32>
    %24 = vector.broadcast %cst_8 : f32 to vector<64x128xf32>
    %25 = arith.mulf %23, %24 : vector<64x128xf32>
    %26 = arith.addf %5, %25 : vector<64x128xf32>
    %cst_14 = arith.constant 1.000000e+00 : f32
    %27 = vector.broadcast %cst_14 : f32 to vector<64x128xf32>
    %28 = arith.cmpf oge, %26, %27 : vector<64x128xf32>
    %cst_15 = arith.constant 0.000000e+00 : f32
    %29 = vector.broadcast %cst_15 : f32 to vector<64x128xf32>
    %30 = arith.select %28, %29, %26 : vector<64x128xi1>, vector<64x128xf32>
    %31 = arith.extui %28 : vector<64x128xi1> to vector<64x128xi32>
    %32 = arith.sitofp %31 : vector<64x128xi32> to vector<64x128xf32>
    %33 = arith.truncf %32 : vector<64x128xf32> to vector<64x128xbf16>
    %cst_16 = arith.constant dense<0.000000e+00> : vector<64x128xf32>
    %34 = tpu.matmul %33, %1, %cst_16 {dimension_numbers = #tpu.dot_dimension_numbers<[1], [0], [0], [1], [0, 0, 1, 1], [], []>} : vector<64x128xbf16>, vector<128x128xbf16>, vector<64x128xf32> -> vector<64x128xf32>
    %35 = vector.broadcast %3 : vector<1x128xf32> to vector<64x128xf32>
    %36 = arith.addf %34, %35 : vector<64x128xf32>
    %37 = arith.index_cast %c0_i32 : i32 to index
    %c0_17 = arith.constant 0 : index
    %c0_18 = arith.constant 0 : index
    %38 = vector.load %arg6[%37, %c0_17, %c0_18] : memref<2x64x128xf32, #tpu.memory_space<vmem>>, vector<1x64x128xf32>
    %39 = vector.shape_cast %38 : vector<1x64x128xf32> to vector<64x128xf32>
    %40 = vector.shape_cast %36 : vector<64x128xf32> to vector<1x64x128xf32>
    tpu.vector_store %arg6[%37, %c0_17, %c0_18], %40 {strides = array<i32>} : memref<2x64x128xf32, #tpu.memory_space<vmem>>, vector<1x64x128xf32>,
    %c1_i32 = arith.constant 1 : i32
    %41 = arith.index_cast %c1_i32 : i32 to index
    %c0_19 = arith.constant 0 : index
    %c0_20 = arith.constant 0 : index
    %42 = vector.load %arg1[%41, %c0_19, %c0_20] : memref<2x64x128xf32, #tpu.memory_space<vmem>>, vector<1x64x128xf32>
    %43 = vector.shape_cast %42 : vector<1x64x128xf32> to vector<64x128xf32>
    %44 = arith.subf %43, %16 : vector<64x128xf32>
    %45 = vector.broadcast %cst_8 : f32 to vector<64x128xf32>
    %46 = arith.mulf %44, %45 : vector<64x128xf32>
    %47 = arith.addf %16, %46 : vector<64x128xf32>
    %cst_21 = arith.constant 1.000000e+00 : f32
    %48 = vector.broadcast %cst_21 : f32 to vector<64x128xf32>
    %49 = arith.cmpf oge, %47, %48 : vector<64x128xf32>
    %cst_22 = arith.constant 0.000000e+00 : f32
    %50 = vector.broadcast %cst_22 : f32 to vector<64x128xf32>
    %51 = arith.select %49, %50, %47 : vector<64x128xi1>, vector<64x128xf32>
    %52 = arith.extui %49 : vector<64x128xi1> to vector<64x128xi32>
    %53 = arith.sitofp %52 : vector<64x128xi32> to vector<64x128xf32>
    %54 = arith.truncf %53 : vector<64x128xf32> to vector<64x128xbf16>
    %cst_23 = arith.constant dense<0.000000e+00> : vector<64x128xf32>
    %55 = tpu.matmul %54, %0, %cst_23 {dimension_numbers = #tpu.dot_dimension_numbers<[1], [0], [0], [1], [0, 0, 1, 1], [], []>} : vector<64x128xbf16>, vector<128x128xbf16>, vector<64x128xf32> -> vector<64x128xf32>
    %56 = vector.broadcast %2 : vector<1x128xf32> to vector<64x128xf32>
    %57 = arith.addf %55, %56 : vector<64x128xf32>
    %58 = arith.subf %57, %30 : vector<64x128xf32>
    %59 = vector.broadcast %cst_8 : f32 to vector<64x128xf32>
    %60 = arith.mulf %58, %59 : vector<64x128xf32>
    %61 = arith.addf %30, %60 : vector<64x128xf32>
    %cst_24 = arith.constant 1.000000e+00 : f32
    %62 = vector.broadcast %cst_24 : f32 to vector<64x128xf32>
    %63 = arith.cmpf oge, %61, %62 : vector<64x128xf32>
    %cst_25 = arith.constant 0.000000e+00 : f32
    %64 = vector.broadcast %cst_25 : f32 to vector<64x128xf32>
    %65 = arith.select %63, %64, %61 : vector<64x128xi1>, vector<64x128xf32>
    %66 = arith.extui %63 : vector<64x128xi1> to vector<64x128xi32>
    %67 = arith.sitofp %66 : vector<64x128xi32> to vector<64x128xf32>
    %68 = arith.truncf %67 : vector<64x128xf32> to vector<64x128xbf16>
    %cst_26 = arith.constant dense<0.000000e+00> : vector<64x128xf32>
    %69 = tpu.matmul %68, %1, %cst_26 {dimension_numbers = #tpu.dot_dimension_numbers<[1], [0], [0], [1], [0, 0, 1, 1], [], []>} : vector<64x128xbf16>, vector<128x128xbf16>, vector<64x128xf32> -> vector<64x128xf32>
    %70 = vector.broadcast %3 : vector<1x128xf32> to vector<64x128xf32>
    %71 = arith.addf %69, %70 : vector<64x128xf32>
    %72 = arith.index_cast %c1_i32 : i32 to index
    %c0_27 = arith.constant 0 : index
    %c0_28 = arith.constant 0 : index
    %73 = vector.load %arg6[%72, %c0_27, %c0_28] : memref<2x64x128xf32, #tpu.memory_space<vmem>>, vector<1x64x128xf32>
    %74 = vector.shape_cast %73 : vector<1x64x128xf32> to vector<64x128xf32>
    %75 = vector.shape_cast %71 : vector<64x128xf32> to vector<1x64x128xf32>
    tpu.vector_store %arg6[%72, %c0_27, %c0_28], %75 {strides = array<i32>} : memref<2x64x128xf32, #tpu.memory_space<vmem>>, vector<1x64x128xf32>,
    %c2_i32 = arith.constant 2 : i32
    return
  }
  func.func @transform_0(%arg0: i32) -> (i32, i32, i32) {
    %c0_i32 = arith.constant 0 : i32
    %c0_i32_0 = arith.constant 0 : i32
    %c0_i32_1 = arith.constant 0 : i32
    return %c0_i32, %arg0, %c0_i32_0 : i32, i32, i32
  }
  func.func @transform_1(%arg0: i32) -> (i32, i32) {
    %c0_i32 = arith.constant 0 : i32
    %c0_i32_0 = arith.constant 0 : i32
    %c0_i32_1 = arith.constant 0 : i32
    return %c0_i32, %c0_i32_0 : i32, i32
  }
  func.func @transform_2(%arg0: i32) -> (i32, i32) {
    %c0_i32 = arith.constant 0 : i32
    %c0_i32_0 = arith.constant 0 : i32
    %c0_i32_1 = arith.constant 0 : i32
    return %c0_i32, %c0_i32_0 : i32, i32
  }
  func.func @transform_3(%arg0: i32) -> (i32, i32) {
    %c0_i32 = arith.constant 0 : i32
    %c0_i32_0 = arith.constant 0 : i32
    %c0_i32_1 = arith.constant 0 : i32
    return %c0_i32, %c0_i32_0 : i32, i32
  }
  func.func @transform_4(%arg0: i32) -> (i32, i32) {
    %c0_i32 = arith.constant 0 : i32
    %c0_i32_0 = arith.constant 0 : i32
    %c0_i32_1 = arith.constant 0 : i32
    return %c0_i32, %c0_i32_0 : i32, i32
  }
  func.func @transform_5(%arg0: i32) -> (i32, i32, i32) {
    %c0_i32 = arith.constant 0 : i32
    %c0_i32_0 = arith.constant 0 : i32
    %c0_i32_1 = arith.constant 0 : i32
    return %c0_i32, %arg0, %c0_i32_0 : i32, i32, i32
  }
}

module attributes {stable_mosaic.version = 11 : i64} {
  func.func @_mlp_kernel(%arg0: i32, %arg1: memref<2x64x128xf32, #tpu.memory_space<vmem>>, %arg2: memref<128x128xbf16, #tpu.memory_space<vmem>>, %arg3: memref<1x128xf32, #tpu.memory_space<vmem>>, %arg4: memref<128x128xbf16, #tpu.memory_space<vmem>>, %arg5: memref<1x128xf32, #tpu.memory_space<vmem>>, %arg6: memref<2x64x128xf32, #tpu.memory_space<vmem>>) attributes {dimension_semantics = [#tpu.dimension_semantics<parallel>], iteration_bounds = array<i64: 2>, scalar_prefetch = 0 : i64, scratch_operands = 0 : i64, tpu.core_type = #tpu.core_type<tc>, window_params = [{transform_indices = @transform_0, window_bounds = array<i64: 2, 64, 128>}, {pipeline_mode = #tpu.pipeline_mode<synchronous>, transform_indices = @transform_1, window_bounds = array<i64: 128, 128>}, {pipeline_mode = #tpu.pipeline_mode<synchronous>, transform_indices = @transform_2, window_bounds = array<i64: 1, 128>}, {pipeline_mode = #tpu.pipeline_mode<synchronous>, transform_indices = @transform_3, window_bounds = array<i64: 128, 128>}, {pipeline_mode = #tpu.pipeline_mode<synchronous>, transform_indices = @transform_4, window_bounds = array<i64: 1, 128>}, {transform_indices = @transform_5, window_bounds = array<i64: 2, 64, 128>}]} {
    %c0 = arith.constant 0 : index
    %c0_0 = arith.constant 0 : index
    %0 = vector.load %arg2[%c0, %c0_0] : memref<128x128xbf16, #tpu.memory_space<vmem>>, vector<128x128xbf16>
    %c0_1 = arith.constant 0 : index
    %c0_2 = arith.constant 0 : index
    %1 = vector.load %arg4[%c0_1, %c0_2] : memref<128x128xbf16, #tpu.memory_space<vmem>>, vector<128x128xbf16>
    %c0_3 = arith.constant 0 : index
    %c0_4 = arith.constant 0 : index
    %2 = vector.load %arg3[%c0_3, %c0_4] : memref<1x128xf32, #tpu.memory_space<vmem>>, vector<1x128xf32>
    %c0_5 = arith.constant 0 : index
    %c0_6 = arith.constant 0 : index
    %3 = vector.load %arg5[%c0_5, %c0_6] : memref<1x128xf32, #tpu.memory_space<vmem>>, vector<1x128xf32>
    %cst = arith.constant 0.000000e+00 : f32
    %4 = vector.broadcast %cst : f32 to vector<64x128xf32>
    %cst_7 = arith.constant 0.000000e+00 : f32
    %5 = vector.broadcast %cst_7 : f32 to vector<64x128xf32>
    %cst_8 = arith.constant 5.000000e-01 : f32
    %c0_i32 = arith.constant 0 : i32
    %6 = arith.index_cast %c0_i32 : i32 to index
    %c0_9 = arith.constant 0 : index
    %c0_10 = arith.constant 0 : index
    %7 = vector.load %arg1[%6, %c0_9, %c0_10] : memref<2x64x128xf32, #tpu.memory_space<vmem>>, vector<1x64x128xf32>
    %8 = vector.shape_cast %7 : vector<1x64x128xf32> to vector<64x128xf32>
    %9 = arith.subf %8, %4 : vector<64x128xf32>
    %10 = vector.broadcast %cst_8 : f32 to vector<64x128xf32>
    %11 = arith.mulf %9, %10 : vector<64x128xf32>
    %12 = arith.addf %4, %11 : vector<64x128xf32>
    %cst_11 = arith.constant 1.000000e+00 : f32
    %13 = vector.broadcast %cst_11 : f32 to vector<64x128xf32>
    %14 = arith.cmpf oge, %12, %13 : vector<64x128xf32>
    %cst_12 = arith.constant 0.000000e+00 : f32
    %15 = vector.broadcast %cst_12 : f32 to vector<64x128xf32>
    %16 = arith.select %14, %15, %12 : vector<64x128xi1>, vector<64x128xf32>
    %17 = arith.extui %14 : vector<64x128xi1> to vector<64x128xi32>
    %18 = arith.sitofp %17 : vector<64x128xi32> to vector<64x128xf32>
    %19 = arith.truncf %18 : vector<64x128xf32> to vector<64x128xbf16>
    %cst_13 = arith.constant dense<0.000000e+00> : vector<64x128xf32>
    %20 = tpu.matmul %19, %0, %cst_13 {dimension_numbers = #tpu.dot_dimension_numbers<[1], [0], [0], [1], [0, 0, 1, 1], [], []>} : vector<64x128xbf16>, vector<128x128xbf16>, vector<64x128xf32> -> vector<64x128xf32>
    %21 = vector.broadcast %2 : vector<1x128xf32> to vector<64x128xf32>
    %22 = arith.addf %20, %21 : vector<64x128xf32>
    %23 = arith.subf %22, %5 : vector<64x128xf32>
    %24 = vector.broadcast %cst_8 : f32 to vector<64x128xf32>
    %25 = arith.mulf %23, %24 : vector<64x128xf32>
    %26 = arith.addf %5, %25 : vector<64x128xf32>
    %cst_14 = arith.constant 1.000000e+00 : f32
    %27 = vector.broadcast %cst_14 : f32 to vector<64x128xf32>
    %28 = arith.cmpf oge, %26, %27 : vector<64x128xf32>
    %cst_15 = arith.constant 0.000000e+00 : f32
    %29 = vector.broadcast %cst_15 : f32 to vector<64x128xf32>
    %30 = arith.select %28, %29, %26 : vector<64x128xi1>, vector<64x128xf32>
    %31 = arith.extui %28 : vector<64x128xi1> to vector<64x128xi32>
    %32 = arith.sitofp %31 : vector<64x128xi32> to vector<64x128xf32>
    %33 = arith.truncf %32 : vector<64x128xf32> to vector<64x128xbf16>
    %cst_16 = arith.constant dense<0.000000e+00> : vector<64x128xf32>
    %34 = tpu.matmul %33, %1, %cst_16 {dimension_numbers = #tpu.dot_dimension_numbers<[1], [0], [0], [1], [0, 0, 1, 1], [], []>} : vector<64x128xbf16>, vector<128x128xbf16>, vector<64x128xf32> -> vector<64x128xf32>
    %35 = vector.broadcast %3 : vector<1x128xf32> to vector<64x128xf32>
    %36 = arith.addf %34, %35 : vector<64x128xf32>
    %37 = arith.index_cast %c0_i32 : i32 to index
    %c0_17 = arith.constant 0 : index
    %c0_18 = arith.constant 0 : index
    %38 = vector.load %arg6[%37, %c0_17, %c0_18] : memref<2x64x128xf32, #tpu.memory_space<vmem>>, vector<1x64x128xf32>
    %39 = vector.shape_cast %38 : vector<1x64x128xf32> to vector<64x128xf32>
    %40 = vector.shape_cast %36 : vector<64x128xf32> to vector<1x64x128xf32>
    tpu.vector_store %arg6[%37, %c0_17, %c0_18], %40 {strides = array<i32>} : memref<2x64x128xf32, #tpu.memory_space<vmem>>, vector<1x64x128xf32>,
    %c1_i32 = arith.constant 1 : i32
    %41 = arith.index_cast %c1_i32 : i32 to index
    %c0_19 = arith.constant 0 : index
    %c0_20 = arith.constant 0 : index
    %42 = vector.load %arg1[%41, %c0_19, %c0_20] : memref<2x64x128xf32, #tpu.memory_space<vmem>>, vector<1x64x128xf32>
    %43 = vector.shape_cast %42 : vector<1x64x128xf32> to vector<64x128xf32>
    %44 = arith.subf %43, %16 : vector<64x128xf32>
    %45 = vector.broadcast %cst_8 : f32 to vector<64x128xf32>
    %46 = arith.mulf %44, %45 : vector<64x128xf32>
    %47 = arith.addf %16, %46 : vector<64x128xf32>
    %cst_21 = arith.constant 1.000000e+00 : f32
    %48 = vector.broadcast %cst_21 : f32 to vector<64x128xf32>
    %49 = arith.cmpf oge, %47, %48 : vector<64x128xf32>
    %cst_22 = arith.constant 0.000000e+00 : f32
    %50 = vector.broadcast %cst_22 : f32 to vector<64x128xf32>
    %51 = arith.select %49, %50, %47 : vector<64x128xi1>, vector<64x128xf32>
    %52 = arith.extui %49 : vector<64x128xi1> to vector<64x128xi32>
    %53 = arith.sitofp %52 : vector<64x128xi32> to vector<64x128xf32>
    %54 = arith.truncf %53 : vector<64x128xf32> to vector<64x128xbf16>
    %cst_23 = arith.constant dense<0.000000e+00> : vector<64x128xf32>
    %55 = tpu.matmul %54, %0, %cst_23 {dimension_numbers = #tpu.dot_dimension_numbers<[1], [0], [0], [1], [0, 0, 1, 1], [], []>} : vector<64x128xbf16>, vector<128x128xbf16>, vector<64x128xf32> -> vector<64x128xf32>
    %56 = vector.broadcast %2 : vector<1x128xf32> to vector<64x128xf32>
    %57 = arith.addf %55, %56 : vector<64x128xf32>
    %58 = arith.subf %57, %30 : vector<64x128xf32>
    %59 = vector.broadcast %cst_8 : f32 to vector<64x128xf32>
    %60 = arith.mulf %58, %59 : vector<64x128xf32>
    %61 = arith.addf %30, %60 : vector<64x128xf32>
    %cst_24 = arith.constant 1.000000e+00 : f32
    %62 = vector.broadcast %cst_24 : f32 to vector<64x128xf32>
    %63 = arith.cmpf oge, %61, %62 : vector<64x128xf32>
    %cst_25 = arith.constant 0.000000e+00 : f32
    %64 = vector.broadcast %cst_25 : f32 to vector<64x128xf32>
    %65 = arith.select %63, %64, %61 : vector<64x128xi1>, vector<64x128xf32>
    %66 = arith.extui %63 : vector<64x128xi1> to vector<64x128xi32>
    %67 = arith.sitofp %66 : vector<64x128xi32> to vector<64x128xf32>
    %68 = arith.truncf %67 : vector<64x128xf32> to vector<64x128xbf16>
    %cst_26 = arith.constant dense<0.000000e+00> : vector<64x128xf32>
    %69 = tpu.matmul %68, %1, %cst_26 {dimension_numbers = #tpu.dot_dimension_numbers<[1], [0], [0], [1], [0, 0, 1, 1], [], []>} : vector<64x128xbf16>, vector<128x128xbf16>, vector<64x128xf32> -> vector<64x128xf32>
    %70 = vector.broadcast %3 : vector<1x128xf32> to vector<64x128xf32>
    %71 = arith.addf %69, %70 : vector<64x128xf32>
    %72 = arith.index_cast %c1_i32 : i32 to index
    %c0_27 = arith.constant 0 : index
    %c0_28 = arith.constant 0 : index
    %73 = vector.load %arg6[%72, %c0_27, %c0_28] : memref<2x64x128xf32, #tpu.memory_space<vmem>>, vector<1x64x128xf32>
    %74 = vector.shape_cast %73 : vector<1x64x128xf32> to vector<64x128xf32>
    %75 = vector.shape_cast %71 : vector<64x128xf32> to vector<1x64x128xf32>
    tpu.vector_store %arg6[%72, %c0_27, %c0_28], %75 {strides = array<i32>} : memref<2x64x128xf32, #tpu.memory_space<vmem>>, vector<1x64x128xf32>,
    %c2_i32 = arith.constant 2 : i32
    return
  }
  func.func @transform_0(%arg0: i32) -> (i32, i32, i32) {
    %c0_i32 = arith.constant 0 : i32
    %c0_i32_0 = arith.constant 0 : i32
    %c0_i32_1 = arith.constant 0 : i32
    return %c0_i32, %arg0, %c0_i32_0 : i32, i32, i32
  }
  func.func @transform_1(%arg0: i32) -> (i32, i32) {
    %c0_i32 = arith.constant 0 : i32
    %c0_i32_0 = arith.constant 0 : i32
    %c0_i32_1 = arith.constant 0 : i32
    return %c0_i32, %c0_i32_0 : i32, i32
  }
  func.func @transform_2(%arg0: i32) -> (i32, i32) {
    %c0_i32 = arith.constant 0 : i32
    %c0_i32_0 = arith.constant 0 : i32
    %c0_i32_1 = arith.constant 0 : i32
    return %c0_i32, %c0_i32_0 : i32, i32
  }
  func.func @transform_3(%arg0: i32) -> (i32, i32) {
    %c0_i32 = arith.constant 0 : i32
    %c0_i32_0 = arith.constant 0 : i32
    %c0_i32_1 = arith.constant 0 : i32
    return %c0_i32, %c0_i32_0 : i32, i32
  }
  func.func @transform_4(%arg0: i32) -> (i32, i32) {
    %c0_i32 = arith.constant 0 : i32
    %c0_i32_0 = arith.constant 0 : i32
    %c0_i32_1 = arith.constant 0 : i32
    return %c0_i32, %c0_i32_0 : i32, i32
  }
  func.func @transform_5(%arg0: i32) -> (i32, i32, i32) {
    %c0_i32 = arith.constant 0 : i32
    %c0_i32_0 = arith.constant 0 : i32
    %c0_i32_1 = arith.constant 0 : i32
    return %c0_i32, %arg0, %c0_i32_0 : i32, i32, i32
  }
}

</mosaic_0001>

<llo_original>
// kernel: tpu_custom_call.1
$region0: #{tpu_custom_call.1}
  #allocation0 [shape = 'u32[]', space=smem, size = 0x4, offset = 0x4, fixed_abs, tag = 'smem constant byte address 0x4 - core index']
  #allocation1 [shape = 'u32[144,128]{1,0:T(1,128)}', space=vmem, size = 0x12000, scoped, tag = 'internal scratch']
  #allocation9 [shape = 's32[]', space=sflag, size = 0x4, offset = 0, fixed_abs, tag = 'sflag constant byte address 0x0 - dummy sync flag']
  #allocation11 [shape = 's32[]', space=sflag, size = 0x4, offset = 0, fixed_abs, tag = 'sflag constant byte address 0x0 - dummy sync flag']
  %s0 = inlined_call_operand.hbm [shape: f32[2,128,128], index: 0, kind: input, shape index: {}]
  %s1 = inlined_call_operand.hbm [shape: bf16[128,128], index: 1, kind: input, shape index: {}]
  %s2 = inlined_call_operand.vmem [shape: f32[1,128], index: 2, kind: input, shape index: {}]
  %s3 = inlined_call_operand.hbm [shape: bf16[128,128], index: 3, kind: input, shape index: {}]
  %s4 = inlined_call_operand.vmem [shape: f32[1,128], index: 4, kind: input, shape index: {}]
  %s5 = inlined_call_operand.hbm [shape: f32[2,128,128], index: 5, kind: output, shape index: {}]
  %s6 = sld [smem:[#allocation0]]
  $region65: #{tpu_custom_call.1} parent=0
    _
  %s8 = ssub.s32 1, %s6
  %s9 = scalar_select 0, %s8, %s6
  $region1: #{tpu_custom_call.1} parent=0
    #allocation2 [shape = 'u8[131072]{0}', space=vmem, size = 0x20000, scoped, tag = 'input window, operand 0']
    #allocation3 [shape = 's32[2]{0}', space=sflag, size = 0x8, scoped, tag = 'scoped memory for tpu_custom_call.1']
    #allocation4 [shape = 's32[2]{0}', space=sflag, size = 0x8, scoped, tag = 'scoped memory for tpu_custom_call.1']
    #allocation5 [shape = 'u8[32768]{0}', space=vmem, size = 0x8000, scoped, tag = 'input window, operand 1, single buffered']
    #allocation6 [shape = 's32[1]{0}', space=sflag, size = 0x4, scoped, tag = 'scoped memory for tpu_custom_call.1']
    #allocation7 [shape = 'u8[32768]{0}', space=vmem, size = 0x8000, scoped, tag = 'input window, operand 3, single buffered']
    #allocation8 [shape = 'u8[131072]{0}', space=vmem, size = 0x20000, scoped, tag = 'output window, operand 0']
    %10 = vsyncpa [#allocation3], 0
    %s11 = scalar_lea.sflag [#allocation3], 1
    %12 = vsyncpa %s11, 0
    %13 = vsyncpa [#allocation6], 0
    %14 = vsyncpa [#allocation4], 0
    %s15 = scalar_lea.sflag [#allocation4], 1
    %16 = vsyncpa %s15, 0
    loop: start=0, step=1, limit=4
    $region2: #{tpu_custom_call.1} parent=1 // loop_pre_header
      _
    $region3: #{tpu_custom_call.1} parent=1 // loop_header
      %s18 = sphi 0, %s22
      %p19 = scmp.ge.s32.totalorder %s18, 4
      %s28 = sphi 0, %s30
      %s31 = sphi 0, %s28
      %s32 = sphi 0, %s31
      %s48 = sphi 0, %s32
      %s52 = sphi 0, %s52
      %s54 = sphi 0, %s52
      %s55 = sphi 0, %s54
      %s69 = sphi 0, %s55
      %s73 = sphi 0, %s73
      %s75 = sphi 0, %s73
      %s76 = sphi 0, %s75
      %s90 = sphi 0, %s76
      %s94 = sphi 0, %s94
      %s96 = sphi 0, %s94
      %s97 = sphi 0, %s96
      %s111 = sphi 0, %s97
      %s115 = sphi 0, %s115
      %s117 = sphi 0, %s115
      %s118 = sphi 0, %s117
      %s132 = sphi 0, %s118
      %s138 = sphi 0, %s140
      %s141 = sphi 0, %s138
      %s142 = sphi 0, %s141
      %s158 = sphi 0, %s142
    $region4: #{tpu_custom_call.1} parent=1 // loop_header_branch
      %21 = sbr.rel (%p19) target = $region8
    $region5: #{tpu_custom_call.1} parent=1 // loop_body
      %s23 = ssub.s32 %s18, 1
      %s24 = ssub.s32 %s18, 2
      %s25 = sadd.s32 %s18, 1
      %s26 = ssub.s32 %s18, %s25
      %p27 = scmp.eq.s32.totalorder %s26, 0
      %s29 = sadd.s32 %s28, 1
      %s30 = scalar_select %p27, %s28, %s29
      %p33 = pneg %p27
      %p34 = scmp.eq.s32.totalorder %s18, 1
      %p35 = por %p33, %p34
      %p36 = scmp.ne.s32.totalorder %s28, %s31
      %p37 = scmp.eq.s32.totalorder %s18, 0
      %p38 = por %p36, %p37
      %p39 = scmp.ne.s32.totalorder %s28, %s31
      %p40 = scmp.eq.s32.totalorder %s23, 1
      %p41 = por %p39, %p40
      %p42 = scmp.ne.s32.totalorder %s31, %s32
      %p43 = scmp.eq.s32.totalorder %s23, 0
      %p44 = por %p42, %p43
      %p45 = scmp.ne.s32.totalorder %s31, %s32
      %p46 = scmp.eq.s32.totalorder %s24, 1
      %p47 = por %p45, %p46
      %p49 = scmp.ne.s32.totalorder %s32, %s48
      %p50 = scmp.eq.s32.totalorder %s24, 0
      %p51 = por %p49, %p50
      %s53 = sadd.s32 %s52, 1
      %p56 = scmp.eq.s32.totalorder %s18, 1
      %p57 = scmp.ne.s32.totalorder %s52, %s54
      %p58 = scmp.eq.s32.totalorder %s18, 0
      %p59 = por %p57, %p58
      %p60 = scmp.ne.s32.totalorder %s52, %s54
      %p61 = scmp.eq.s32.totalorder %s23, 1
      %p62 = por %p60, %p61
      %p63 = scmp.ne.s32.totalorder %s54, %s55
      %p64 = scmp.eq.s32.totalorder %s23, 0
      %p65 = por %p63, %p64
      %p66 = scmp.ne.s32.totalorder %s54, %s55
      %p67 = scmp.eq.s32.totalorder %s24, 1
      %p68 = por %p66, %p67
      %p70 = scmp.ne.s32.totalorder %s55, %s69
      %p71 = scmp.eq.s32.totalorder %s24, 0
      %p72 = por %p70, %p71
      %s74 = sadd.s32 %s73, 1
      %p77 = scmp.eq.s32.totalorder %s18, 1
      %p78 = scmp.ne.s32.totalorder %s73, %s75
      %p79 = scmp.eq.s32.totalorder %s18, 0
      %p80 = por %p78, %p79
      %p81 = scmp.ne.s32.totalorder %s73, %s75
      %p82 = scmp.eq.s32.totalorder %s23, 1
      %p83 = por %p81, %p82
      %p84 = scmp.ne.s32.totalorder %s75, %s76
      %p85 = scmp.eq.s32.totalorder %s23, 0
      %p86 = por %p84, %p85
      %p87 = scmp.ne.s32.totalorder %s75, %s76
      %p88 = scmp.eq.s32.totalorder %s24, 1
      %p89 = por %p87, %p88
      %p91 = scmp.ne.s32.totalorder %s76, %s90
      %p92 = scmp.eq.s32.totalorder %s24, 0
      %p93 = por %p91, %p92
      %s95 = sadd.s32 %s94, 1
      %p98 = scmp.eq.s32.totalorder %s18, 1
      %p99 = scmp.ne.s32.totalorder %s94, %s96
      %p100 = scmp.eq.s32.totalorder %s18, 0
      %p101 = por %p99, %p100
      %p102 = scmp.ne.s32.totalorder %s94, %s96
      %p103 = scmp.eq.s32.totalorder %s23, 1
      %p104 = por %p102, %p103
      %p105 = scmp.ne.s32.totalorder %s96, %s97
      %p106 = scmp.eq.s32.totalorder %s23, 0
      %p107 = por %p105, %p106
      %p108 = scmp.ne.s32.totalorder %s96, %s97
      %p109 = scmp.eq.s32.totalorder %s24, 1
      %p110 = por %p108, %p109
      %p112 = scmp.ne.s32.totalorder %s97, %s111
      %p113 = scmp.eq.s32.totalorder %s24, 0
      %p114 = por %p112, %p113
      %s116 = sadd.s32 %s115, 1
      %p119 = scmp.eq.s32.totalorder %s18, 1
      %p120 = scmp.ne.s32.totalorder %s115, %s117
      %p121 = scmp.eq.s32.totalorder %s18, 0
      %p122 = por %p120, %p121
      %p123 = scmp.ne.s32.totalorder %s115, %s117
      %p124 = scmp.eq.s32.totalorder %s23, 1
      %p125 = por %p123, %p124
      %p126 = scmp.ne.s32.totalorder %s117, %s118
      %p127 = scmp.eq.s32.totalorder %s23, 0
      %p128 = por %p126, %p127
      %p129 = scmp.ne.s32.totalorder %s117, %s118
      %p130 = scmp.eq.s32.totalorder %s24, 1
      %p131 = por %p129, %p130
      %p133 = scmp.ne.s32.totalorder %s118, %s132
      %p134 = scmp.eq.s32.totalorder %s24, 0
      %p135 = por %p133, %p134
      %s136 = ssub.s32 %s18, %s25
      %p137 = scmp.eq.s32.totalorder %s136, 0
      %s139 = sadd.s32 %s138, 1
      %s140 = scalar_select %p137, %s138, %s139
      %p143 = pneg %p137
      %p144 = scmp.eq.s32.totalorder %s18, 1
      %p145 = por %p143, %p144
      %p146 = scmp.ne.s32.totalorder %s138, %s141
      %p147 = scmp.eq.s32.totalorder %s18, 0
      %p148 = por %p146, %p147
      %p149 = scmp.ne.s32.totalorder %s138, %s141
      %p150 = scmp.eq.s32.totalorder %s23, 1
      %p151 = por %p149, %p150
      %p152 = scmp.ne.s32.totalorder %s141, %s142
      %p153 = scmp.eq.s32.totalorder %s23, 0
      %p154 = por %p152, %p153
      %p155 = scmp.ne.s32.totalorder %s141, %s142
      %p156 = scmp.eq.s32.totalorder %s24, 1
      %p157 = por %p155, %p156
      %p159 = scmp.ne.s32.totalorder %s142, %s158
      %p160 = scmp.eq.s32.totalorder %s24, 0
      %p161 = por %p159, %p160
      %p162 = scmp.le.s32.totalorder 1, %s18
      %p163 = scmp.lt.s32.totalorder %s18, 3
      %p164 = pnand %p162, %p163
      %p165 = pneg %p164
      // Predicated region
      $region9: #{tpu_custom_call.1} parent=5 // pred_check
        _
      $region10: #{tpu_custom_call.1} parent=5 // pred_check_branch
        %167 = sbr.rel (%p164) target = $region12
      $region11: #{tpu_custom_call.1} parent=5 // pred_region
        %s168 = ssub.s32 %s18, 1
        // Predicated region
        $region13: #{tpu_custom_call.1} parent=11 // pred_check
          %p169 = pneg %p65
        $region14: #{tpu_custom_call.1} parent=11 // pred_check_branch
          %171 = sbr.rel (%p169) target = $region16
        $region15: #{tpu_custom_call.1} parent=11 // pred_region
          %s173 = ssub.s32 1024, 1024
          %174 = vsyncadd [#allocation6], %s173
          %s175 = sshll.u32 [#allocation5], 4
          %s176 = int_to_ptr.vmem [resolvable:$true] %s175
          %181 = dma.hbm_to_vmem [thread:$0]  %s1, 1024, %s176, [#allocation6], 64, 64, 4
        $region16: #{tpu_custom_call.1} parent=11 // pred_fallthru
          _
        // Predicated region
        $region17: #{tpu_custom_call.1} parent=11 // pred_check
          %p182 = pneg %p86
        $region18: #{tpu_custom_call.1} parent=11 // pred_check_branch
          %184 = sbr.rel (%p182) target = $region20
        $region19: #{tpu_custom_call.1} parent=11 // pred_region
          _
        $region20: #{tpu_custom_call.1} parent=11 // pred_fallthru
          _
        // Predicated region
        $region21: #{tpu_custom_call.1} parent=11 // pred_check
          %p185 = pneg %p107
        $region22: #{tpu_custom_call.1} parent=11 // pred_check_branch
          %187 = sbr.rel (%p185) target = $region24
        $region23: #{tpu_custom_call.1} parent=11 // pred_region
          %s189 = ssub.s32 1024, 1024
          %190 = vsyncadd [#allocation6], %s189
          %s191 = sshll.u32 [#allocation7], 4
          %s192 = int_to_ptr.vmem [resolvable:$true] %s191
          %197 = dma.hbm_to_vmem [thread:$0]  %s3, 1024, %s192, [#allocation6], 64, 64, 4
        $region24: #{tpu_custom_call.1} parent=11 // pred_fallthru
          _
        // Predicated region
        $region25: #{tpu_custom_call.1} parent=11 // pred_check
          %p198 = pneg %p128
        $region26: #{tpu_custom_call.1} parent=11 // pred_check_branch
          %200 = sbr.rel (%p198) target = $region28
        $region27: #{tpu_custom_call.1} parent=11 // pred_region
          _
        $region28: #{tpu_custom_call.1} parent=11 // pred_fallthru
          _
      $region12: #{tpu_custom_call.1} parent=5 // pred_fallthru
        _
      %p201 = scmp.lt.s32.totalorder %s18, 2
      // Predicated region
      $region29: #{tpu_custom_call.1} parent=5 // pred_check
        %p202 = pneg %p201
      $region30: #{tpu_custom_call.1} parent=5 // pred_check_branch
        %204 = sbr.rel (%p202) target = $region32
      $region31: #{tpu_custom_call.1} parent=5 // pred_region
        // Predicated region
        $region33: #{tpu_custom_call.1} parent=31 // pred_check
          %p205 = pneg %p38
        $region34: #{tpu_custom_call.1} parent=31 // pred_check_branch
          %207 = sbr.rel (%p205) target = $region36
        $region35: #{tpu_custom_call.1} parent=31 // pred_region
          #allocation10 [shape = 'u32[6]{0}', space=smem, size = 0x18, scoped, tag = 'DMA stride descriptor']
          %s208 = sand.u32 %s28, 1
          %s209 = scalar_lea.sflag [#allocation3], %s208
          %s210 = sand.u32 %s28, 1
          %s211 = smul.addr %s210, 128
          %s212 = scalar_lea.vmem [#allocation2], %s211
          %s213 = smul.u32 8, %s18
          %s215 = ssub.s32 2048, 2048
          %216 = vsyncadd %s209, %s215
          %s217 = smul.addr %s213, 128
          %s218 = scalar_lea.hbm %s0, %s217
          %s220 = sshll.u32 1, 14
          %s221 = sxor.u32 4294967295, %s220
          %s223 = sld [smem:[#allocation0]]
          %s224 = sadd.s32 2, %s223
          %s226 = sshll.u32 7, 26
          %s227 = sxor.u32 4294967295, %s226
          %s228 = sand.u32 0, %s227
          %s229 = sshll.u32 %s224, 26
          %s230 = sor.u32 %s228, %s229
          %s231 = sshll.u32 %s212, 4
          %s232 = int_to_ptr.vmem [resolvable:$true] %s231
          %238 = sst [smem:[#allocation10]] 2048
          %s239 = scalar_lea.smem [#allocation10], 1
          %240 = sst [smem:[%s239]] 1024
          %s241 = scalar_lea.smem [#allocation10], 2
          %242 = sst [smem:[%s241]] 8
          %s243 = scalar_lea.smem [#allocation10], 3
          %244 = sst [smem:[%s243]] 128
          %s245 = scalar_lea.smem [#allocation10], 4
          %246 = sst [smem:[%s245]] 128
          %s247 = scalar_lea.smem [#allocation10], 5
          %248 = sst [smem:[%s247]] 8
          %250 = dma.general %s218, 2048, %s232, %s209, [#allocation9], [#allocation10], %s230, 0
        $region36: #{tpu_custom_call.1} parent=31 // pred_fallthru
          _
      $region32: #{tpu_custom_call.1} parent=5 // pred_fallthru
        _
      %p251 = scmp.le.s32.totalorder 1, %s18
      %p252 = scmp.lt.s32.totalorder %s18, 3
      %p253 = pnand %p251, %p252
      %p254 = pneg %p253
      // Predicated region
      $region37: #{tpu_custom_call.1} parent=5 // pred_check
        _
      $region38: #{tpu_custom_call.1} parent=5 // pred_check_branch
        %256 = sbr.rel (%p253) target = $region40
      $region39: #{tpu_custom_call.1} parent=5 // pred_region
        %s257 = ssub.s32 %s18, 1
        %s258 = sand.u32 %s31, 1
        %s259 = scalar_lea.sflag [#allocation3], %s258
        %s260 = sand.u32 %s31, 1
        %s261 = smul.addr %s260, 128
        %s262 = scalar_lea.vmem [#allocation2], %s261
        // Predicated region
        $region41: #{tpu_custom_call.1} parent=39 // pred_check
          %p263 = pneg %p44
        $region42: #{tpu_custom_call.1} parent=39 // pred_check_branch
          %265 = sbr.rel (%p263) target = $region44
        $region43: #{tpu_custom_call.1} parent=39 // pred_region
          %266 = dma.done %s259, 2048
        $region44: #{tpu_custom_call.1} parent=39 // pred_fallthru
          _
        // Predicated region
        $region45: #{tpu_custom_call.1} parent=39 // pred_check
          %p267 = pneg %p65
        $region46: #{tpu_custom_call.1} parent=39 // pred_check_branch
          %269 = sbr.rel (%p267) target = $region48
        $region47: #{tpu_custom_call.1} parent=39 // pred_region
          %270 = dma.done [#allocation6], 1024
        $region48: #{tpu_custom_call.1} parent=39 // pred_fallthru
          _
        // Predicated region
        $region49: #{tpu_custom_call.1} parent=39 // pred_check
          %p271 = pneg %p107
        $region50: #{tpu_custom_call.1} parent=39 // pred_check_branch
          %273 = sbr.rel (%p271) target = $region52
        $region51: #{tpu_custom_call.1} parent=39 // pred_region
          %274 = dma.done [#allocation6], 1024
        $region52: #{tpu_custom_call.1} parent=39 // pred_fallthru
          _
        %s275 = sand.u32 %s31, 1
        %s276 = scalar_lea.sflag [#allocation3], %s275
        %s277 = sand.u32 %s31, 1
        %s278 = smul.addr %s277, 128
        %s279 = scalar_lea.vmem [#allocation2], %s278
        %p280 = pneg %p44
        %p281 = pneg %p41
        %p282 = pneg %p65
        %p283 = pneg %p62
        %p284 = pneg %p86
        %p285 = pneg %p83
        %p286 = pneg %p107
        %p287 = pneg %p104
        %p288 = pneg %p128
        %p289 = pneg %p125
        %p290 = pneg %p154
        %p291 = pneg %p151
        %s292 = sand.u32 %s141, 1
        %s293 = scalar_lea.sflag [#allocation4], %s292
        %s294 = sand.u32 %s141, 1
        %s295 = smul.addr %s294, 128
        %s296 = scalar_lea.vmem [#allocation8], %s295
        %s297 = smul.u32 8, %s23
        %s298 = smul.u32 8, %s23
        %v300 = vld [vmem:[#allocation5] sm:$0xf]
        %v301 = vld [vmem:[#allocation5 + $0x4] sm:$0xf]
        %v302 = vld [vmem:[#allocation5 + $0x8] sm:$0xf]
        %v303 = vld [vmem:[#allocation5 + $0xc] sm:$0xf]
        %v304 = vld [vmem:[#allocation5 + $0x10] sm:$0xf]
        %v305 = vld [vmem:[#allocation5 + $0x14] sm:$0xf]
        %v306 = vld [vmem:[#allocation5 + $0x18] sm:$0xf]
        %v307 = vld [vmem:[#allocation5 + $0x1c] sm:$0xf]
        %v308 = vld [vmem:[#allocation5 + $0x20] sm:$0xf]
        %v309 = vld [vmem:[#allocation5 + $0x24] sm:$0xf]
        %v310 = vld [vmem:[#allocation5 + $0x28] sm:$0xf]
        %v311 = vld [vmem:[#allocation5 + $0x2c] sm:$0xf]
        %v312 = vld [vmem:[#allocation5 + $0x30] sm:$0xf]
        %v313 = vld [vmem:[#allocation5 + $0x34] sm:$0xf]
        %v314 = vld [vmem:[#allocation5 + $0x38] sm:$0xf]
        %v315 = vld [vmem:[#allocation5 + $0x3c] sm:$0xf]
        %v316 = vld [vmem:[#allocation7] sm:$0xf]
        %v317 = vld [vmem:[#allocation7 + $0x4] sm:$0xf]
        %v318 = vld [vmem:[#allocation7 + $0x8] sm:$0xf]
        %v319 = vld [vmem:[#allocation7 + $0xc] sm:$0xf]
        %v320 = vld [vmem:[#allocation7 + $0x10] sm:$0xf]
        %v321 = vld [vmem:[#allocation7 + $0x14] sm:$0xf]
        %v322 = vld [vmem:[#allocation7 + $0x18] sm:$0xf]
        %v323 = vld [vmem:[#allocation7 + $0x1c] sm:$0xf]
        %v324 = vld [vmem:[#allocation7 + $0x20] sm:$0xf]
        %v325 = vld [vmem:[#allocation7 + $0x24] sm:$0xf]
        %v326 = vld [vmem:[#allocation7 + $0x28] sm:$0xf]
        %v327 = vld [vmem:[#allocation7 + $0x2c] sm:$0xf]
        %v328 = vld [vmem:[#allocation7 + $0x30] sm:$0xf]
        %v329 = vld [vmem:[#allocation7 + $0x34] sm:$0xf]
        %v330 = vld [vmem:[#allocation7 + $0x38] sm:$0xf]
        %v331 = vld [vmem:[#allocation7 + $0x3c] sm:$0xf]
        %v332 = vld [vmem:[%s2] sm:$0x1]
        %v333 = vld [vmem:[%s4] sm:$0x1]
        %v334 = vld [vmem:[%s262] sm:$0xff]
        %v335 = vld [vmem:[%s262 + $0x8] sm:$0xff]
        %v336 = vld [vmem:[%s262 + $0x10] sm:$0xff]
        %v337 = vld [vmem:[%s262 + $0x18] sm:$0xff]
        %v338 = vld [vmem:[%s262 + $0x20] sm:$0xff]
        %v339 = vld [vmem:[%s262 + $0x28] sm:$0xff]
        %v340 = vld [vmem:[%s262 + $0x30] sm:$0xff]
        %v341 = vld [vmem:[%s262 + $0x38] sm:$0xff]
        %v342 = vmul.f32 %v334, 0.5
        %v343 = vmul.f32 %v335, 0.5
        %v344 = vmul.f32 %v336, 0.5
        %v345 = vmul.f32 %v337, 0.5
        %v346 = vmul.f32 %v338, 0.5
        %v347 = vmul.f32 %v339, 0.5
        %v348 = vmul.f32 %v340, 0.5
        %v349 = vmul.f32 %v341, 0.5
        %v350 = vadd.f32 %v342, 0.0
        %v351 = vadd.f32 %v343, 0.0
        %v352 = vadd.f32 %v344, 0.0
        %v353 = vadd.f32 %v345, 0.0
        %v354 = vadd.f32 %v346, 0.0
        %v355 = vadd.f32 %v347, 0.0
        %v356 = vadd.f32 %v348, 0.0
        %v357 = vadd.f32 %v349, 0.0
        %vm358 = vcmp.ge.f32.partialorder %v350, 1.0
        %vm359 = vcmp.ge.f32.partialorder %v351, 1.0
        %vm360 = vcmp.ge.f32.partialorder %v352, 1.0
        %vm361 = vcmp.ge.f32.partialorder %v353, 1.0
        %vm362 = vcmp.ge.f32.partialorder %v354, 1.0
        %vm363 = vcmp.ge.f32.partialorder %v355, 1.0
        %vm364 = vcmp.ge.f32.partialorder %v356, 1.0
        %vm365 = vcmp.ge.f32.partialorder %v357, 1.0
        %v366 = vsel %vm358, 0.0, %v350
        %v367 = vsel %vm359, 0.0, %v351
        %v368 = vsel %vm360, 0.0, %v352
        %v369 = vsel %vm361, 0.0, %v353
        %v370 = vsel %vm362, 0.0, %v354
        %v371 = vsel %vm363, 0.0, %v355
        %v372 = vsel %vm364, 0.0, %v356
        %v373 = vsel %vm365, 0.0, %v357
        %v374 = vsel %vm358, 1, 0
        %v375 = vsel %vm359, 1, 0
        %v376 = vsel %vm360, 1, 0
        %v377 = vsel %vm361, 1, 0
        %v378 = vsel %vm362, 1, 0
        %v379 = vsel %vm363, 1, 0
        %v380 = vsel %vm364, 1, 0
        %v381 = vsel %vm365, 1, 0
        %v382 = vcvt.s32.f32 %v374
        %v383 = vcvt.s32.f32 %v375
        %v384 = vcvt.s32.f32 %v376
        %v385 = vcvt.s32.f32 %v377
        %v386 = vcvt.s32.f32 %v378
        %v387 = vcvt.s32.f32 %v379
        %v388 = vcvt.s32.f32 %v380
        %v389 = vcvt.s32.f32 %v381
        %v390 = vpack.c.bf16 %v383, %v382
        %v391 = vpack.c.bf16 %v385, %v384
        %v392 = vpack.c.bf16 %v387, %v386
        %v393 = vpack.c.bf16 %v389, %v388
        %v395 = vlaneseq
        %v396 = vshrl.u32 %v395, 7
        %v397 = vsub.s32 0, %v396
        %v398 = vrot.slane %v332, %v397
        %v416 = vunpack.c.l.b16 %v300
        %v417 = vunpack.c.l.b16 %v301
        %v418 = vunpack.c.l.b16 %v302
        %v419 = vunpack.c.l.b16 %v303
        %v420 = vunpack.c.l.b16 %v304
        %v421 = vunpack.c.l.b16 %v305
        %v422 = vunpack.c.l.b16 %v306
        %v423 = vunpack.c.l.b16 %v307
        %v424 = vunpack.c.l.b16 %v308
        %v425 = vunpack.c.l.b16 %v309
        %v426 = vunpack.c.l.b16 %v310
        %v427 = vunpack.c.l.b16 %v311
        %v428 = vunpack.c.l.b16 %v312
        %v429 = vunpack.c.l.b16 %v313
        %v430 = vunpack.c.l.b16 %v314
        %v431 = vunpack.c.l.b16 %v315
        %v432 = vpack.c.b16 %v417, %v416
        %v433 = vpack.c.b16 %v419, %v418
        %v434 = vpack.c.b16 %v421, %v420
        %v435 = vpack.c.b16 %v423, %v422
        %v436 = vpack.c.b16 %v425, %v424
        %v437 = vpack.c.b16 %v427, %v426
        %v438 = vpack.c.b16 %v429, %v428
        %v439 = vpack.c.b16 %v431, %v430
        %448 = vmatprep.subr.bf16.mxu0 0
        %449 = vmatpush1.bf16.msra.mxu0 %v432
        %450 = vmatprep.subr.bf16.mxu0 0
        %451 = vmatpush1.bf16.msra.mxu0 %v433
        %452 = vmatprep.subr.bf16.mxu0 0
        %453 = vmatpush1.bf16.msra.mxu0 %v434
        %454 = vmatprep.subr.bf16.mxu0 0
        %455 = vmatpush1.bf16.msra.mxu0 %v435
        %456 = vmatprep.subr.bf16.mxu0 0
        %457 = vmatpush1.bf16.msra.mxu0 %v436
        %458 = vmatprep.subr.bf16.mxu0 0
        %459 = vmatpush1.bf16.msra.mxu0 %v437
        %460 = vmatprep.subr.bf16.mxu0 0
        %461 = vmatpush1.bf16.msra.mxu0 %v438
        %462 = vmatprep.subr.bf16.mxu0 0
        %463 = vmatpush1.bf16.msra.mxu0 %v439
        %464 = vmatprep.subr.bf16.mxu0 0
        %465 = vmatpush1.bf16.msra.mxu0 0
        %466 = vmatprep.subr.bf16.mxu0 0
        %467 = vmatpush1.bf16.msra.mxu0 0
        %468 = vmatprep.subr.bf16.mxu0 0
        %469 = vmatpush1.bf16.msra.mxu0 0
        %470 = vmatprep.subr.bf16.mxu0 0
        %471 = vmatpush1.bf16.msra.mxu0 0
        %472 = vmatprep.subr.bf16.mxu0 0
        %473 = vmatpush1.bf16.msra.mxu0 0
        %474 = vmatprep.subr.bf16.mxu0 0
        %475 = vmatpush1.bf16.msra.mxu0 0
        %476 = vmatprep.subr.bf16.mxu0 0
        %477 = vmatpush1.bf16.msra.mxu0 0
        %478 = vmatprep.subr.bf16.mxu0 0
        %479 = vmatpush1.bf16.msra.mxu0 0
        %480 = vmatprep.mubr.bf16.mxu0 0
        %481 = vmatmul.mubr.bf16.gmra.mrb[0].mxu0 %v390
        %v482 = vpop.f32.mrb[0].mxu0
        %v483 = vadd.f32 %v398, %v482
        %v484 = vpop.f32.mrb[0].mxu0
        %v485 = vpop.f32.mrb[0].mxu0
        %v486 = vadd.f32 %v398, %v485
        %v487 = vpop.f32.mrb[0].mxu0
        %488 = vmatprep.mubr.bf16.mxu0 0
        %489 = vmatmul.mubr.bf16.gmra.mrb[0].mxu0 %v391
        %v490 = vpop.f32.mrb[0].mxu0
        %v491 = vadd.f32 %v398, %v490
        %v492 = vpop.f32.mrb[0].mxu0
        %v493 = vpop.f32.mrb[0].mxu0
        %v494 = vadd.f32 %v398, %v493
        %v495 = vpop.f32.mrb[0].mxu0
        %496 = vmatprep.mubr.bf16.mxu0 0
        %497 = vmatmul.mubr.bf16.gmra.mrb[0].mxu0 %v392
        %v498 = vpop.f32.mrb[0].mxu0
        %v499 = vadd.f32 %v398, %v498
        %v500 = vpop.f32.mrb[0].mxu0
        %v501 = vpop.f32.mrb[0].mxu0
        %v502 = vadd.f32 %v398, %v501
        %v503 = vpop.f32.mrb[0].mxu0
        %504 = vmatprep.mubr.bf16.mxu0 0
        %505 = vmatmul.mubr.bf16.gmra.mrb[0].mxu0 %v393
        %v506 = vpop.f32.mrb[0].mxu0
        %v507 = vadd.f32 %v398, %v506
        %v508 = vpop.f32.mrb[0].mxu0
        %v509 = vpop.f32.mrb[0].mxu0
        %v510 = vadd.f32 %v398, %v509
        %v511 = vpop.f32.mrb[0].mxu0
        %512 = vdwg.mxu0
        %v513 = vmul.f32 %v483, 0.5
        %v514 = vmul.f32 %v486, 0.5
        %v515 = vmul.f32 %v491, 0.5
        %v516 = vmul.f32 %v494, 0.5
        %v517 = vmul.f32 %v499, 0.5
        %v518 = vmul.f32 %v502, 0.5
        %v519 = vmul.f32 %v507, 0.5
        %v520 = vmul.f32 %v510, 0.5
        %v521 = vadd.f32 %v513, 0.0
        %v522 = vadd.f32 %v514, 0.0
        %v523 = vadd.f32 %v515, 0.0
        %v524 = vadd.f32 %v516, 0.0
        %v525 = vadd.f32 %v517, 0.0
        %v526 = vadd.f32 %v518, 0.0
        %v527 = vadd.f32 %v519, 0.0
        %v528 = vadd.f32 %v520, 0.0
        %vm529 = vcmp.ge.f32.partialorder %v521, 1.0
        %vm530 = vcmp.ge.f32.partialorder %v522, 1.0
        %vm531 = vcmp.ge.f32.partialorder %v523, 1.0
        %vm532 = vcmp.ge.f32.partialorder %v524, 1.0
        %vm533 = vcmp.ge.f32.partialorder %v525, 1.0
        %vm534 = vcmp.ge.f32.partialorder %v526, 1.0
        %vm535 = vcmp.ge.f32.partialorder %v527, 1.0
        %vm536 = vcmp.ge.f32.partialorder %v528, 1.0
        %v537 = vsel %vm529, 0.0, %v521
        %v538 = vsel %vm530, 0.0, %v522
        %v539 = vsel %vm531, 0.0, %v523
        %v540 = vsel %vm532, 0.0, %v524
        %v541 = vsel %vm533, 0.0, %v525
        %v542 = vsel %vm534, 0.0, %v526
        %v543 = vsel %vm535, 0.0, %v527
        %v544 = vsel %vm536, 0.0, %v528
        %v545 = vsel %vm529, 1, 0
        %v546 = vsel %vm530, 1, 0
        %v547 = vsel %vm531, 1, 0
        %v548 = vsel %vm532, 1, 0
        %v549 = vsel %vm533, 1, 0
        %v550 = vsel %vm534, 1, 0
        %v551 = vsel %vm535, 1, 0
        %v552 = vsel %vm536, 1, 0
        %v553 = vcvt.s32.f32 %v545
        %v554 = vcvt.s32.f32 %v546
        %v555 = vcvt.s32.f32 %v547
        %v556 = vcvt.s32.f32 %v548
        %v557 = vcvt.s32.f32 %v549
        %v558 = vcvt.s32.f32 %v550
        %v559 = vcvt.s32.f32 %v551
        %v560 = vcvt.s32.f32 %v552
        %v561 = vpack.c.bf16 %v554, %v553
        %v562 = vpack.c.bf16 %v556, %v555
        %v563 = vpack.c.bf16 %v558, %v557
        %v564 = vpack.c.bf16 %v560, %v559
        %v566 = vlaneseq
        %v567 = vshrl.u32 %v566, 7
        %v568 = vsub.s32 0, %v567
        %v569 = vrot.slane %v333, %v568
        %v587 = vunpack.c.l.b16 %v316
        %v588 = vunpack.c.l.b16 %v317
        %v589 = vunpack.c.l.b16 %v318
        %v590 = vunpack.c.l.b16 %v319
        %v591 = vunpack.c.l.b16 %v320
        %v592 = vunpack.c.l.b16 %v321
        %v593 = vunpack.c.l.b16 %v322
        %v594 = vunpack.c.l.b16 %v323
        %v595 = vunpack.c.l.b16 %v324
        %v596 = vunpack.c.l.b16 %v325
        %v597 = vunpack.c.l.b16 %v326
        %v598 = vunpack.c.l.b16 %v327
        %v599 = vunpack.c.l.b16 %v328
        %v600 = vunpack.c.l.b16 %v329
        %v601 = vunpack.c.l.b16 %v330
        %v602 = vunpack.c.l.b16 %v331
        %v603 = vpack.c.b16 %v588, %v587
        %v604 = vpack.c.b16 %v590, %v589
        %v605 = vpack.c.b16 %v592, %v591
        %v606 = vpack.c.b16 %v594, %v593
        %v607 = vpack.c.b16 %v596, %v595
        %v608 = vpack.c.b16 %v598, %v597
        %v609 = vpack.c.b16 %v600, %v599
        %v610 = vpack.c.b16 %v602, %v601
        %619 = vmatprep.subr.bf16.mxu0 0
        %620 = vmatpush1.bf16.msra.mxu0 %v603
        %621 = vmatprep.subr.bf16.mxu0 0
        %622 = vmatpush1.bf16.msra.mxu0 %v604
        %623 = vmatprep.subr.bf16.mxu0 0
        %624 = vmatpush1.bf16.msra.mxu0 %v605
        %625 = vmatprep.subr.bf16.mxu0 0
        %626 = vmatpush1.bf16.msra.mxu0 %v606
        %627 = vmatprep.subr.bf16.mxu0 0
        %628 = vmatpush1.bf16.msra.mxu0 %v607
        %629 = vmatprep.subr.bf16.mxu0 0
        %630 = vmatpush1.bf16.msra.mxu0 %v608
        %631 = vmatprep.subr.bf16.mxu0 0
        %632 = vmatpush1.bf16.msra.mxu0 %v609
        %633 = vmatprep.subr.bf16.mxu0 0
        %634 = vmatpush1.bf16.msra.mxu0 %v610
        %635 = vmatprep.subr.bf16.mxu0 0
        %636 = vmatpush1.bf16.msra.mxu0 0
        %637 = vmatprep.subr.bf16.mxu0 0
        %638 = vmatpush1.bf16.msra.mxu0 0
        %639 = vmatprep.subr.bf16.mxu0 0
        %640 = vmatpush1.bf16.msra.mxu0 0
        %641 = vmatprep.subr.bf16.mxu0 0
        %642 = vmatpush1.bf16.msra.mxu0 0
        %643 = vmatprep.subr.bf16.mxu0 0
        %644 = vmatpush1.bf16.msra.mxu0 0
        %645 = vmatprep.subr.bf16.mxu0 0
        %646 = vmatpush1.bf16.msra.mxu0 0
        %647 = vmatprep.subr.bf16.mxu0 0
        %648 = vmatpush1.bf16.msra.mxu0 0
        %649 = vmatprep.subr.bf16.mxu0 0
        %650 = vmatpush1.bf16.msra.mxu0 0
        %651 = vmatprep.mubr.bf16.mxu0 0
        %652 = vmatmul.mubr.bf16.gmra.mrb[0].mxu0 %v561
        %v653 = vpop.f32.mrb[0].mxu0
        %v654 = vadd.f32 %v569, %v653
        %v655 = vpop.f32.mrb[0].mxu0
        %v656 = vpop.f32.mrb[0].mxu0
        %v657 = vadd.f32 %v569, %v656
        %v658 = vpop.f32.mrb[0].mxu0
        %659 = vmatprep.mubr.bf16.mxu0 0
        %660 = vmatmul.mubr.bf16.gmra.mrb[0].mxu0 %v562
        %v661 = vpop.f32.mrb[0].mxu0
        %v662 = vadd.f32 %v569, %v661
        %v663 = vpop.f32.mrb[0].mxu0
        %v664 = vpop.f32.mrb[0].mxu0
        %v665 = vadd.f32 %v569, %v664
        %v666 = vpop.f32.mrb[0].mxu0
        %667 = vmatprep.mubr.bf16.mxu0 0
        %668 = vmatmul.mubr.bf16.gmra.mrb[0].mxu0 %v563
        %v669 = vpop.f32.mrb[0].mxu0
        %v670 = vadd.f32 %v569, %v669
        %v671 = vpop.f32.mrb[0].mxu0
        %v672 = vpop.f32.mrb[0].mxu0
        %v673 = vadd.f32 %v569, %v672
        %v674 = vpop.f32.mrb[0].mxu0
        %675 = vmatprep.mubr.bf16.mxu0 0
        %676 = vmatmul.mubr.bf16.gmra.mrb[0].mxu0 %v564
        %v677 = vpop.f32.mrb[0].mxu0
        %v678 = vadd.f32 %v569, %v677
        %v679 = vpop.f32.mrb[0].mxu0
        %v680 = vpop.f32.mrb[0].mxu0
        %v681 = vadd.f32 %v569, %v680
        %v682 = vpop.f32.mrb[0].mxu0
        %683 = vdwg.mxu0
        %684 = vst [vmem:[%s296] sm:$0xff] %v654
        %685 = vst [vmem:[%s296 + $0x8] sm:$0xff] %v657
        %686 = vst [vmem:[%s296 + $0x10] sm:$0xff] %v662
        %687 = vst [vmem:[%s296 + $0x18] sm:$0xff] %v665
        %688 = vst [vmem:[%s296 + $0x20] sm:$0xff] %v670
        %689 = vst [vmem:[%s296 + $0x28] sm:$0xff] %v673
        %690 = vst [vmem:[%s296 + $0x30] sm:$0xff] %v678
        %691 = vst [vmem:[%s296 + $0x38] sm:$0xff] %v681
        %s692 = scalar_lea.vmem %s262, 64 [#allocation2]
        %v693 = vld [vmem:[%s692] sm:$0xff]
        %v694 = vld [vmem:[%s692 + $0x8] sm:$0xff]
        %v695 = vld [vmem:[%s692 + $0x10] sm:$0xff]
        %v696 = vld [vmem:[%s692 + $0x18] sm:$0xff]
        %v697 = vld [vmem:[%s692 + $0x20] sm:$0xff]
        %v698 = vld [vmem:[%s692 + $0x28] sm:$0xff]
        %v699 = vld [vmem:[%s692 + $0x30] sm:$0xff]
        %v700 = vld [vmem:[%s692 + $0x38] sm:$0xff]
        %v701 = vsub.f32 %v693, %v366
        %v702 = vsub.f32 %v694, %v367
        %v703 = vsub.f32 %v695, %v368
        %v704 = vsub.f32 %v696, %v369
        %v705 = vsub.f32 %v697, %v370
        %v706 = vsub.f32 %v698, %v371
        %v707 = vsub.f32 %v699, %v372
        %v708 = vsub.f32 %v700, %v373
        %v709 = vmul.f32 %v701, 0.5
        %v710 = vmul.f32 %v702, 0.5
        %v711 = vmul.f32 %v703, 0.5
        %v712 = vmul.f32 %v704, 0.5
        %v713 = vmul.f32 %v705, 0.5
        %v714 = vmul.f32 %v706, 0.5
        %v715 = vmul.f32 %v707, 0.5
        %v716 = vmul.f32 %v708, 0.5
        %v717 = vadd.f32 %v366, %v709
        %v718 = vadd.f32 %v367, %v710
        %v719 = vadd.f32 %v368, %v711
        %v720 = vadd.f32 %v369, %v712
        %v721 = vadd.f32 %v370, %v713
        %v722 = vadd.f32 %v371, %v714
        %v723 = vadd.f32 %v372, %v715
        %v724 = vadd.f32 %v373, %v716
        %vm725 = vcmp.ge.f32.partialorder %v717, 1.0
        %vm726 = vcmp.ge.f32.partialorder %v718, 1.0
        %vm727 = vcmp.ge.f32.partialorder %v719, 1.0
        %vm728 = vcmp.ge.f32.partialorder %v720, 1.0
        %vm729 = vcmp.ge.f32.partialorder %v721, 1.0
        %vm730 = vcmp.ge.f32.partialorder %v722, 1.0
        %vm731 = vcmp.ge.f32.partialorder %v723, 1.0
        %vm732 = vcmp.ge.f32.partialorder %v724, 1.0
        %v733 = vsel %vm725, 1, 0
        %v734 = vsel %vm726, 1, 0
        %v735 = vsel %vm727, 1, 0
        %v736 = vsel %vm728, 1, 0
        %v737 = vsel %vm729, 1, 0
        %v738 = vsel %vm730, 1, 0
        %v739 = vsel %vm731, 1, 0
        %v740 = vsel %vm732, 1, 0
        %v741 = vcvt.s32.f32 %v733
        %v742 = vcvt.s32.f32 %v734
        %v743 = vcvt.s32.f32 %v735
        %v744 = vcvt.s32.f32 %v736
        %v745 = vcvt.s32.f32 %v737
        %v746 = vcvt.s32.f32 %v738
        %v747 = vcvt.s32.f32 %v739
        %v748 = vcvt.s32.f32 %v740
        %v749 = vpack.c.bf16 %v742, %v741
        %v750 = vpack.c.bf16 %v744, %v743
        %v751 = vpack.c.bf16 %v746, %v745
        %v752 = vpack.c.bf16 %v748, %v747
        %753 = vmatprep.subr.bf16.mxu0 0
        %754 = vmatpush1.bf16.msra.mxu0 %v432
        %755 = vmatprep.subr.bf16.mxu0 0
        %756 = vmatpush1.bf16.msra.mxu0 %v433
        %757 = vmatprep.subr.bf16.mxu0 0
        %758 = vmatpush1.bf16.msra.mxu0 %v434
        %759 = vmatprep.subr.bf16.mxu0 0
        %760 = vmatpush1.bf16.msra.mxu0 %v435
        %761 = vmatprep.subr.bf16.mxu0 0
        %762 = vmatpush1.bf16.msra.mxu0 %v436
        %763 = vmatprep.subr.bf16.mxu0 0
        %764 = vmatpush1.bf16.msra.mxu0 %v437
        %765 = vmatprep.subr.bf16.mxu0 0
        %766 = vmatpush1.bf16.msra.mxu0 %v438
        %767 = vmatprep.subr.bf16.mxu0 0
        %768 = vmatpush1.bf16.msra.mxu0 %v439
        %769 = vmatprep.subr.bf16.mxu0 0
        %770 = vmatpush1.bf16.msra.mxu0 0
        %771 = vmatprep.subr.bf16.mxu0 0
        %772 = vmatpush1.bf16.msra.mxu0 0
        %773 = vmatprep.subr.bf16.mxu0 0
        %774 = vmatpush1.bf16.msra.mxu0 0
        %775 = vmatprep.subr.bf16.mxu0 0
        %776 = vmatpush1.bf16.msra.mxu0 0
        %777 = vmatprep.subr.bf16.mxu0 0
        %778 = vmatpush1.bf16.msra.mxu0 0
        %779 = vmatprep.subr.bf16.mxu0 0
        %780 = vmatpush1.bf16.msra.mxu0 0
        %781 = vmatprep.subr.bf16.mxu0 0
        %782 = vmatpush1.bf16.msra.mxu0 0
        %783 = vmatprep.subr.bf16.mxu0 0
        %784 = vmatpush1.bf16.msra.mxu0 0
        %785 = vmatprep.mubr.bf16.mxu0 0
        %786 = vmatmul.mubr.bf16.gmra.mrb[0].mxu0 %v749
        %v787 = vpop.f32.mrb[0].mxu0
        %v788 = vadd.f32 %v398, %v787
        %v789 = vpop.f32.mrb[0].mxu0
        %v790 = vpop.f32.mrb[0].mxu0
        %v791 = vadd.f32 %v398, %v790
        %v792 = vpop.f32.mrb[0].mxu0
        %793 = vmatprep.mubr.bf16.mxu0 0
        %794 = vmatmul.mubr.bf16.gmra.mrb[0].mxu0 %v750
        %v795 = vpop.f32.mrb[0].mxu0
        %v796 = vadd.f32 %v398, %v795
        %v797 = vpop.f32.mrb[0].mxu0
        %v798 = vpop.f32.mrb[0].mxu0
        %v799 = vadd.f32 %v398, %v798
        %v800 = vpop.f32.mrb[0].mxu0
        %801 = vmatprep.mubr.bf16.mxu0 0
        %802 = vmatmul.mubr.bf16.gmra.mrb[0].mxu0 %v751
        %v803 = vpop.f32.mrb[0].mxu0
        %v804 = vadd.f32 %v398, %v803
        %v805 = vpop.f32.mrb[0].mxu0
        %v806 = vpop.f32.mrb[0].mxu0
        %v807 = vadd.f32 %v398, %v806
        %v808 = vpop.f32.mrb[0].mxu0
        %809 = vmatprep.mubr.bf16.mxu0 0
        %810 = vmatmul.mubr.bf16.gmra.mrb[0].mxu0 %v752
        %v811 = vpop.f32.mrb[0].mxu0
        %v812 = vadd.f32 %v398, %v811
        %v813 = vpop.f32.mrb[0].mxu0
        %v814 = vpop.f32.mrb[0].mxu0
        %v815 = vadd.f32 %v398, %v814
        %v816 = vpop.f32.mrb[0].mxu0
        %817 = vdwg.mxu0
        %v818 = vsub.f32 %v788, %v537
        %v819 = vsub.f32 %v791, %v538
        %v820 = vsub.f32 %v796, %v539
        %v821 = vsub.f32 %v799, %v540
        %v822 = vsub.f32 %v804, %v541
        %v823 = vsub.f32 %v807, %v542
        %v824 = vsub.f32 %v812, %v543
        %v825 = vsub.f32 %v815, %v544
        %v826 = vmul.f32 %v818, 0.5
        %v827 = vmul.f32 %v819, 0.5
        %v828 = vmul.f32 %v820, 0.5
        %v829 = vmul.f32 %v821, 0.5
        %v830 = vmul.f32 %v822, 0.5
        %v831 = vmul.f32 %v823, 0.5
        %v832 = vmul.f32 %v824, 0.5
        %v833 = vmul.f32 %v825, 0.5
        %v834 = vadd.f32 %v537, %v826
        %v835 = vadd.f32 %v538, %v827
        %v836 = vadd.f32 %v539, %v828
        %v837 = vadd.f32 %v540, %v829
        %v838 = vadd.f32 %v541, %v830
        %v839 = vadd.f32 %v542, %v831
        %v840 = vadd.f32 %v543, %v832
        %v841 = vadd.f32 %v544, %v833
        %vm842 = vcmp.ge.f32.partialorder %v834, 1.0
        %vm843 = vcmp.ge.f32.partialorder %v835, 1.0
        %vm844 = vcmp.ge.f32.partialorder %v836, 1.0
        %vm845 = vcmp.ge.f32.partialorder %v837, 1.0
        %vm846 = vcmp.ge.f32.partialorder %v838, 1.0
        %vm847 = vcmp.ge.f32.partialorder %v839, 1.0
        %vm848 = vcmp.ge.f32.partialorder %v840, 1.0
        %vm849 = vcmp.ge.f32.partialorder %v841, 1.0
        %v850 = vsel %vm842, 1, 0
        %v851 = vsel %vm843, 1, 0
        %v852 = vsel %vm844, 1, 0
        %v853 = vsel %vm845, 1, 0
        %v854 = vsel %vm846, 1, 0
        %v855 = vsel %vm847, 1, 0
        %v856 = vsel %vm848, 1, 0
        %v857 = vsel %vm849, 1, 0
        %v858 = vcvt.s32.f32 %v850
        %v859 = vcvt.s32.f32 %v851
        %v860 = vcvt.s32.f32 %v852
        %v861 = vcvt.s32.f32 %v853
        %v862 = vcvt.s32.f32 %v854
        %v863 = vcvt.s32.f32 %v855
        %v864 = vcvt.s32.f32 %v856
        %v865 = vcvt.s32.f32 %v857
        %v866 = vpack.c.bf16 %v859, %v858
        %v867 = vpack.c.bf16 %v861, %v860
        %v868 = vpack.c.bf16 %v863, %v862
        %v869 = vpack.c.bf16 %v865, %v864
        %870 = vmatprep.subr.bf16.mxu0 0
        %871 = vmatpush1.bf16.msra.mxu0 %v603
        %872 = vmatprep.subr.bf16.mxu0 0
        %873 = vmatpush1.bf16.msra.mxu0 %v604
        %874 = vmatprep.subr.bf16.mxu0 0
        %875 = vmatpush1.bf16.msra.mxu0 %v605
        %876 = vmatprep.subr.bf16.mxu0 0
        %877 = vmatpush1.bf16.msra.mxu0 %v606
        %878 = vmatprep.subr.bf16.mxu0 0
        %879 = vmatpush1.bf16.msra.mxu0 %v607
        %880 = vmatprep.subr.bf16.mxu0 0
        %881 = vmatpush1.bf16.msra.mxu0 %v608
        %882 = vmatprep.subr.bf16.mxu0 0
        %883 = vmatpush1.bf16.msra.mxu0 %v609
        %884 = vmatprep.subr.bf16.mxu0 0
        %885 = vmatpush1.bf16.msra.mxu0 %v610
        %886 = vmatprep.subr.bf16.mxu0 0
        %887 = vmatpush1.bf16.msra.mxu0 0
        %888 = vmatprep.subr.bf16.mxu0 0
        %889 = vmatpush1.bf16.msra.mxu0 0
        %890 = vmatprep.subr.bf16.mxu0 0
        %891 = vmatpush1.bf16.msra.mxu0 0
        %892 = vmatprep.subr.bf16.mxu0 0
        %893 = vmatpush1.bf16.msra.mxu0 0
        %894 = vmatprep.subr.bf16.mxu0 0
        %895 = vmatpush1.bf16.msra.mxu0 0
        %896 = vmatprep.subr.bf16.mxu0 0
        %897 = vmatpush1.bf16.msra.mxu0 0
        %898 = vmatprep.subr.bf16.mxu0 0
        %899 = vmatpush1.bf16.msra.mxu0 0
        %900 = vmatprep.subr.bf16.mxu0 0
        %901 = vmatpush1.bf16.msra.mxu0 0
        %902 = vmatprep.mubr.bf16.mxu0 0
        %903 = vmatmul.mubr.bf16.gmra.mrb[0].mxu0 %v866
        %v904 = vpop.f32.mrb[0].mxu0
        %v905 = vadd.f32 %v569, %v904
        %v906 = vpop.f32.mrb[0].mxu0
        %v907 = vpop.f32.mrb[0].mxu0
        %v908 = vadd.f32 %v569, %v907
        %v909 = vpop.f32.mrb[0].mxu0
        %910 = vmatprep.mubr.bf16.mxu0 0
        %911 = vmatmul.mubr.bf16.gmra.mrb[0].mxu0 %v867
        %v912 = vpop.f32.mrb[0].mxu0
        %v913 = vadd.f32 %v569, %v912
        %v914 = vpop.f32.mrb[0].mxu0
        %v915 = vpop.f32.mrb[0].mxu0
        %v916 = vadd.f32 %v569, %v915
        %v917 = vpop.f32.mrb[0].mxu0
        %918 = vmatprep.mubr.bf16.mxu0 0
        %919 = vmatmul.mubr.bf16.gmra.mrb[0].mxu0 %v868
        %v920 = vpop.f32.mrb[0].mxu0
        %v921 = vadd.f32 %v569, %v920
        %v922 = vpop.f32.mrb[0].mxu0
        %v923 = vpop.f32.mrb[0].mxu0
        %v924 = vadd.f32 %v569, %v923
        %v925 = vpop.f32.mrb[0].mxu0
        %926 = vmatprep.mubr.bf16.mxu0 0
        %927 = vmatmul.mubr.bf16.gmra.mrb[0].mxu0 %v869
        %v928 = vpop.f32.mrb[0].mxu0
        %v929 = vadd.f32 %v569, %v928
        %v930 = vpop.f32.mrb[0].mxu0
        %v931 = vpop.f32.mrb[0].mxu0
        %v932 = vadd.f32 %v569, %v931
        %v933 = vpop.f32.mrb[0].mxu0
        %934 = vdwg.mxu0
        %s935 = scalar_lea.vmem %s296, 64 [#allocation8]
        %936 = vst [vmem:[%s935] sm:$0xff] %v905
        %937 = vst [vmem:[%s935 + $0x8] sm:$0xff] %v908
        %938 = vst [vmem:[%s935 + $0x10] sm:$0xff] %v913
        %939 = vst [vmem:[%s935 + $0x18] sm:$0xff] %v916
        %940 = vst [vmem:[%s935 + $0x20] sm:$0xff] %v921
        %941 = vst [vmem:[%s935 + $0x28] sm:$0xff] %v924
        %942 = vst [vmem:[%s935 + $0x30] sm:$0xff] %v929
        %943 = vst [vmem:[%s935 + $0x38] sm:$0xff] %v932
        %s944 = sand.u32 %s141, 1
        %s945 = scalar_lea.sflag [#allocation4], %s944
        %s946 = sand.u32 %s141, 1
        %s947 = smul.addr %s946, 128
        %s948 = scalar_lea.vmem [#allocation8], %s947
        // Predicated region
        $region53: #{tpu_custom_call.1} parent=39 // pred_check
          %p949 = pneg %p151
        $region54: #{tpu_custom_call.1} parent=39 // pred_check_branch
          %951 = sbr.rel (%p949) target = $region56
        $region55: #{tpu_custom_call.1} parent=39 // pred_region
          #allocation12 [shape = 'u32[6]{0}', space=smem, size = 0x18, scoped, tag = 'DMA stride descriptor']
          %s952 = smul.u32 8, %s23
          %s954 = ssub.s32 2048, 2048
          %955 = vsyncadd %s945, %s954
          %s956 = smul.addr %s952, 128
          %s957 = scalar_lea.hbm %s5, %s956
          %s959 = sshll.u32 1, 14
          %s960 = sxor.u32 4294967295, %s959
          %s963 = sshll.u32 7, 18
          %s964 = sxor.u32 4294967295, %s963
          %s965 = sand.u32 0, %s964
          %s967 = sor.u32 %s965, 0
          %s969 = sshll.u32 3, 24
          %s970 = sxor.u32 4294967295, %s969
          %s971 = sand.u32 %s967, %s970
          %s973 = sor.u32 %s971, 0
          %s974 = sshll.u32 %s948, 4
          %s975 = int_to_ptr.vmem [resolvable:$true] %s974
          %981 = sst [smem:[#allocation12]] 1024
          %s982 = scalar_lea.smem [#allocation12], 1
          %983 = sst [smem:[%s982]] 2048
          %s984 = scalar_lea.smem [#allocation12], 2
          %985 = sst [smem:[%s984]] 8
          %s986 = scalar_lea.smem [#allocation12], 3
          %987 = sst [smem:[%s986]] 128
          %s988 = scalar_lea.smem [#allocation12], 4
          %989 = sst [smem:[%s988]] 128
          %s990 = scalar_lea.smem [#allocation12], 5
          %991 = sst [smem:[%s990]] 8
          %993 = dma.general %s975, 2048, %s957, %s945, [#allocation11], [#allocation12], %s973, 0
        $region56: #{tpu_custom_call.1} parent=39 // pred_fallthru
          _
      $region40: #{tpu_custom_call.1} parent=5 // pred_fallthru
        _
      %p994 = scmp.le.s32.totalorder 2, %s18
      // Predicated region
      $region57: #{tpu_custom_call.1} parent=5 // pred_check
        %p995 = pneg %p994
      $region58: #{tpu_custom_call.1} parent=5 // pred_check_branch
        %997 = sbr.rel (%p995) target = $region60
      $region59: #{tpu_custom_call.1} parent=5 // pred_region
        %s998 = ssub.s32 %s18, 2
        // Predicated region
        $region61: #{tpu_custom_call.1} parent=59 // pred_check
          %p999 = pneg %p157
        $region62: #{tpu_custom_call.1} parent=59 // pred_check_branch
          %1001 = sbr.rel (%p999) target = $region64
        $region63: #{tpu_custom_call.1} parent=59 // pred_region
          %s1002 = sand.u32 %s142, 1
          %s1003 = scalar_lea.sflag [#allocation4], %s1002
          %s1004 = sand.u32 %s142, 1
          %s1005 = smul.addr %s1004, 128
          %s1006 = scalar_lea.vmem [#allocation8], %s1005
          %1007 = dma.done %s1003, 2048
        $region64: #{tpu_custom_call.1} parent=59 // pred_fallthru
          _
      $region60: #{tpu_custom_call.1} parent=5 // pred_fallthru
        _
    $region6: #{tpu_custom_call.1} parent=1 // loop_footer
      %s22 = sadd.s32 1, %s18
    $region7: #{tpu_custom_call.1} parent=1 // loop_footer_branch
      %17 = sbr.rel target = $region3
    $region8: #{tpu_custom_call.1} parent=1 // loop_exit
      _
    %1008 = vsyncpa [#allocation3], 1
    %s1009 = scalar_lea.sflag [#allocation3], 1
    %1010 = vsyncpa %s1009, 1
    %1011 = vsyncpa [#allocation6], 1
    %1012 = vsyncpa [#allocation4], 1
    %s1013 = scalar_lea.sflag [#allocation4], 1
    %1014 = vsyncpa %s1013, 1

// kernel: tpu_custom_call.1
$region0: #{tpu_custom_call.1}
  #allocation0 [shape = 'u32[]', space=smem, size = 0x4, offset = 0x4, fixed_abs, tag = 'smem constant byte address 0x4 - core index']
  #allocation1 [shape = 'u32[144,128]{1,0:T(1,128)}', space=vmem, size = 0x12000, scoped, tag = 'internal scratch']
  #allocation9 [shape = 's32[]', space=sflag, size = 0x4, offset = 0, fixed_abs, tag = 'sflag constant byte address 0x0 - dummy sync flag']
  #allocation11 [shape = 's32[]', space=sflag, size = 0x4, offset = 0, fixed_abs, tag = 'sflag constant byte address 0x0 - dummy sync flag']
  %s0 = inlined_call_operand.hbm [shape: f32[2,128,128], index: 0, kind: input, shape index: {}]
  %s1 = inlined_call_operand.hbm [shape: bf16[128,128], index: 1, kind: input, shape index: {}]
  %s2 = inlined_call_operand.vmem [shape: f32[1,128], index: 2, kind: input, shape index: {}]
  %s3 = inlined_call_operand.hbm [shape: bf16[128,128], index: 3, kind: input, shape index: {}]
  %s4 = inlined_call_operand.vmem [shape: f32[1,128], index: 4, kind: input, shape index: {}]
  %s5 = inlined_call_operand.hbm [shape: f32[2,128,128], index: 5, kind: output, shape index: {}]
  %s6 = sld [smem:[#allocation0]]
  $region65: #{tpu_custom_call.1} parent=0
    _
  %s8 = ssub.s32 1, %s6
  %s9 = scalar_select 0, %s8, %s6
  $region1: #{tpu_custom_call.1} parent=0
    #allocation2 [shape = 'u8[131072]{0}', space=vmem, size = 0x20000, scoped, tag = 'input window, operand 0']
    #allocation3 [shape = 's32[2]{0}', space=sflag, size = 0x8, scoped, tag = 'scoped memory for tpu_custom_call.1']
    #allocation4 [shape = 's32[2]{0}', space=sflag, size = 0x8, scoped, tag = 'scoped memory for tpu_custom_call.1']
    #allocation5 [shape = 'u8[32768]{0}', space=vmem, size = 0x8000, scoped, tag = 'input window, operand 1, single buffered']
    #allocation6 [shape = 's32[1]{0}', space=sflag, size = 0x4, scoped, tag = 'scoped memory for tpu_custom_call.1']
    #allocation7 [shape = 'u8[32768]{0}', space=vmem, size = 0x8000, scoped, tag = 'input window, operand 3, single buffered']
    #allocation8 [shape = 'u8[131072]{0}', space=vmem, size = 0x20000, scoped, tag = 'output window, operand 0']
    %10 = vsyncpa [#allocation3], 0
    %s11 = scalar_lea.sflag [#allocation3], 1
    %12 = vsyncpa %s11, 0
    %13 = vsyncpa [#allocation6], 0
    %14 = vsyncpa [#allocation4], 0
    %s15 = scalar_lea.sflag [#allocation4], 1
    %16 = vsyncpa %s15, 0
    loop: start=0, step=1, limit=4
    $region2: #{tpu_custom_call.1} parent=1 // loop_pre_header
      _
    $region3: #{tpu_custom_call.1} parent=1 // loop_header
      %s18 = sphi 0, %s22
      %p19 = scmp.ge.s32.totalorder %s18, 4
      %s28 = sphi 0, %s30
      %s31 = sphi 0, %s28
      %s32 = sphi 0, %s31
      %s48 = sphi 0, %s32
      %s52 = sphi 0, %s52
      %s54 = sphi 0, %s52
      %s55 = sphi 0, %s54
      %s69 = sphi 0, %s55
      %s73 = sphi 0, %s73
      %s75 = sphi 0, %s73
      %s76 = sphi 0, %s75
      %s90 = sphi 0, %s76
      %s94 = sphi 0, %s94
      %s96 = sphi 0, %s94
      %s97 = sphi 0, %s96
      %s111 = sphi 0, %s97
      %s115 = sphi 0, %s115
      %s117 = sphi 0, %s115
      %s118 = sphi 0, %s117
      %s132 = sphi 0, %s118
      %s138 = sphi 0, %s140
      %s141 = sphi 0, %s138
      %s142 = sphi 0, %s141
      %s158 = sphi 0, %s142
    $region4: #{tpu_custom_call.1} parent=1 // loop_header_branch
      %21 = sbr.rel (%p19) target = $region8
    $region5: #{tpu_custom_call.1} parent=1 // loop_body
      %s23 = ssub.s32 %s18, 1
      %s24 = ssub.s32 %s18, 2
      %s25 = sadd.s32 %s18, 1
      %s26 = ssub.s32 %s18, %s25
      %p27 = scmp.eq.s32.totalorder %s26, 0
      %s29 = sadd.s32 %s28, 1
      %s30 = scalar_select %p27, %s28, %s29
      %p33 = pneg %p27
      %p34 = scmp.eq.s32.totalorder %s18, 1
      %p35 = por %p33, %p34
      %p36 = scmp.ne.s32.totalorder %s28, %s31
      %p37 = scmp.eq.s32.totalorder %s18, 0
      %p38 = por %p36, %p37
      %p39 = scmp.ne.s32.totalorder %s28, %s31
      %p40 = scmp.eq.s32.totalorder %s23, 1
      %p41 = por %p39, %p40
      %p42 = scmp.ne.s32.totalorder %s31, %s32
      %p43 = scmp.eq.s32.totalorder %s23, 0
      %p44 = por %p42, %p43
      %p45 = scmp.ne.s32.totalorder %s31, %s32
      %p46 = scmp.eq.s32.totalorder %s24, 1
      %p47 = por %p45, %p46
      %p49 = scmp.ne.s32.totalorder %s32, %s48
      %p50 = scmp.eq.s32.totalorder %s24, 0
      %p51 = por %p49, %p50
      %s53 = sadd.s32 %s52, 1
      %p56 = scmp.eq.s32.totalorder %s18, 1
      %p57 = scmp.ne.s32.totalorder %s52, %s54
      %p58 = scmp.eq.s32.totalorder %s18, 0
      %p59 = por %p57, %p58
      %p60 = scmp.ne.s32.totalorder %s52, %s54
      %p61 = scmp.eq.s32.totalorder %s23, 1
      %p62 = por %p60, %p61
      %p63 = scmp.ne.s32.totalorder %s54, %s55
      %p64 = scmp.eq.s32.totalorder %s23, 0
      %p65 = por %p63, %p64
      %p66 = scmp.ne.s32.totalorder %s54, %s55
      %p67 = scmp.eq.s32.totalorder %s24, 1
      %p68 = por %p66, %p67
      %p70 = scmp.ne.s32.totalorder %s55, %s69
      %p71 = scmp.eq.s32.totalorder %s24, 0
      %p72 = por %p70, %p71
      %s74 = sadd.s32 %s73, 1
      %p77 = scmp.eq.s32.totalorder %s18, 1
      %p78 = scmp.ne.s32.totalorder %s73, %s75
      %p79 = scmp.eq.s32.totalorder %s18, 0
      %p80 = por %p78, %p79
      %p81 = scmp.ne.s32.totalorder %s73, %s75
      %p82 = scmp.eq.s32.totalorder %s23, 1
      %p83 = por %p81, %p82
      %p84 = scmp.ne.s32.totalorder %s75, %s76
      %p85 = scmp.eq.s32.totalorder %s23, 0
      %p86 = por %p84, %p85
      %p87 = scmp.ne.s32.totalorder %s75, %s76
      %p88 = scmp.eq.s32.totalorder %s24, 1
      %p89 = por %p87, %p88
      %p91 = scmp.ne.s32.totalorder %s76, %s90
      %p92 = scmp.eq.s32.totalorder %s24, 0
      %p93 = por %p91, %p92
      %s95 = sadd.s32 %s94, 1
      %p98 = scmp.eq.s32.totalorder %s18, 1
      %p99 = scmp.ne.s32.totalorder %s94, %s96
      %p100 = scmp.eq.s32.totalorder %s18, 0
      %p101 = por %p99, %p100
      %p102 = scmp.ne.s32.totalorder %s94, %s96
      %p103 = scmp.eq.s32.totalorder %s23, 1
      %p104 = por %p102, %p103
      %p105 = scmp.ne.s32.totalorder %s96, %s97
      %p106 = scmp.eq.s32.totalorder %s23, 0
      %p107 = por %p105, %p106
      %p108 = scmp.ne.s32.totalorder %s96, %s97
      %p109 = scmp.eq.s32.totalorder %s24, 1
      %p110 = por %p108, %p109
      %p112 = scmp.ne.s32.totalorder %s97, %s111
      %p113 = scmp.eq.s32.totalorder %s24, 0
      %p114 = por %p112, %p113
      %s116 = sadd.s32 %s115, 1
      %p119 = scmp.eq.s32.totalorder %s18, 1
      %p120 = scmp.ne.s32.totalorder %s115, %s117
      %p121 = scmp.eq.s32.totalorder %s18, 0
      %p122 = por %p120, %p121
      %p123 = scmp.ne.s32.totalorder %s115, %s117
      %p124 = scmp.eq.s32.totalorder %s23, 1
      %p125 = por %p123, %p124
      %p126 = scmp.ne.s32.totalorder %s117, %s118
      %p127 = scmp.eq.s32.totalorder %s23, 0
      %p128 = por %p126, %p127
      %p129 = scmp.ne.s32.totalorder %s117, %s118
      %p130 = scmp.eq.s32.totalorder %s24, 1
      %p131 = por %p129, %p130
      %p133 = scmp.ne.s32.totalorder %s118, %s132
      %p134 = scmp.eq.s32.totalorder %s24, 0
      %p135 = por %p133, %p134
      %s136 = ssub.s32 %s18, %s25
      %p137 = scmp.eq.s32.totalorder %s136, 0
      %s139 = sadd.s32 %s138, 1
      %s140 = scalar_select %p137, %s138, %s139
      %p143 = pneg %p137
      %p144 = scmp.eq.s32.totalorder %s18, 1
      %p145 = por %p143, %p144
      %p146 = scmp.ne.s32.totalorder %s138, %s141
      %p147 = scmp.eq.s32.totalorder %s18, 0
      %p148 = por %p146, %p147
      %p149 = scmp.ne.s32.totalorder %s138, %s141
      %p150 = scmp.eq.s32.totalorder %s23, 1
      %p151 = por %p149, %p150
      %p152 = scmp.ne.s32.totalorder %s141, %s142
      %p153 = scmp.eq.s32.totalorder %s23, 0
      %p154 = por %p152, %p153
      %p155 = scmp.ne.s32.totalorder %s141, %s142
      %p156 = scmp.eq.s32.totalorder %s24, 1
      %p157 = por %p155, %p156
      %p159 = scmp.ne.s32.totalorder %s142, %s158
      %p160 = scmp.eq.s32.totalorder %s24, 0
      %p161 = por %p159, %p160
      %p162 = scmp.le.s32.totalorder 1, %s18
      %p163 = scmp.lt.s32.totalorder %s18, 3
      %p164 = pnand %p162, %p163
      %p165 = pneg %p164
      // Predicated region
      $region9: #{tpu_custom_call.1} parent=5 // pred_check
        _
      $region10: #{tpu_custom_call.1} parent=5 // pred_check_branch
        %167 = sbr.rel (%p164) target = $region12
      $region11: #{tpu_custom_call.1} parent=5 // pred_region
        %s168 = ssub.s32 %s18, 1
        // Predicated region
        $region13: #{tpu_custom_call.1} parent=11 // pred_check
          %p169 = pneg %p65
        $region14: #{tpu_custom_call.1} parent=11 // pred_check_branch
          %171 = sbr.rel (%p169) target = $region16
        $region15: #{tpu_custom_call.1} parent=11 // pred_region
          %s173 = ssub.s32 1024, 1024
          %174 = vsyncadd [#allocation6], %s173
          %s175 = sshll.u32 [#allocation5], 4
          %s176 = int_to_ptr.vmem [resolvable:$true] %s175
          %181 = dma.hbm_to_vmem [thread:$0]  %s1, 1024, %s176, [#allocation6], 64, 64, 4
        $region16: #{tpu_custom_call.1} parent=11 // pred_fallthru
          _
        // Predicated region
        $region17: #{tpu_custom_call.1} parent=11 // pred_check
          %p182 = pneg %p86
        $region18: #{tpu_custom_call.1} parent=11 // pred_check_branch
          %184 = sbr.rel (%p182) target = $region20
        $region19: #{tpu_custom_call.1} parent=11 // pred_region
          _
        $region20: #{tpu_custom_call.1} parent=11 // pred_fallthru
          _
        // Predicated region
        $region21: #{tpu_custom_call.1} parent=11 // pred_check
          %p185 = pneg %p107
        $region22: #{tpu_custom_call.1} parent=11 // pred_check_branch
          %187 = sbr.rel (%p185) target = $region24
        $region23: #{tpu_custom_call.1} parent=11 // pred_region
          %s189 = ssub.s32 1024, 1024
          %190 = vsyncadd [#allocation6], %s189
          %s191 = sshll.u32 [#allocation7], 4
          %s192 = int_to_ptr.vmem [resolvable:$true] %s191
          %197 = dma.hbm_to_vmem [thread:$0]  %s3, 1024, %s192, [#allocation6], 64, 64, 4
        $region24: #{tpu_custom_call.1} parent=11 // pred_fallthru
          _
        // Predicated region
        $region25: #{tpu_custom_call.1} parent=11 // pred_check
          %p198 = pneg %p128
        $region26: #{tpu_custom_call.1} parent=11 // pred_check_branch
          %200 = sbr.rel (%p198) target = $region28
        $region27: #{tpu_custom_call.1} parent=11 // pred_region
          _
        $region28: #{tpu_custom_call.1} parent=11 // pred_fallthru
          _
      $region12: #{tpu_custom_call.1} parent=5 // pred_fallthru
        _
      %p201 = scmp.lt.s32.totalorder %s18, 2
      // Predicated region
      $region29: #{tpu_custom_call.1} parent=5 // pred_check
        %p202 = pneg %p201
      $region30: #{tpu_custom_call.1} parent=5 // pred_check_branch
        %204 = sbr.rel (%p202) target = $region32
      $region31: #{tpu_custom_call.1} parent=5 // pred_region
        // Predicated region
        $region33: #{tpu_custom_call.1} parent=31 // pred_check
          %p205 = pneg %p38
        $region34: #{tpu_custom_call.1} parent=31 // pred_check_branch
          %207 = sbr.rel (%p205) target = $region36
        $region35: #{tpu_custom_call.1} parent=31 // pred_region
          #allocation10 [shape = 'u32[6]{0}', space=smem, size = 0x18, scoped, tag = 'DMA stride descriptor']
          %s208 = sand.u32 %s28, 1
          %s209 = scalar_lea.sflag [#allocation3], %s208
          %s210 = sand.u32 %s28, 1
          %s211 = smul.addr %s210, 128
          %s212 = scalar_lea.vmem [#allocation2], %s211
          %s213 = smul.u32 8, %s18
          %s215 = ssub.s32 2048, 2048
          %216 = vsyncadd %s209, %s215
          %s217 = smul.addr %s213, 128
          %s218 = scalar_lea.hbm %s0, %s217
          %s220 = sshll.u32 1, 14
          %s221 = sxor.u32 4294967295, %s220
          %s223 = sld [smem:[#allocation0]]
          %s224 = sadd.s32 2, %s223
          %s226 = sshll.u32 7, 26
          %s227 = sxor.u32 4294967295, %s226
          %s228 = sand.u32 0, %s227
          %s229 = sshll.u32 %s224, 26
          %s230 = sor.u32 %s228, %s229
          %s231 = sshll.u32 %s212, 4
          %s232 = int_to_ptr.vmem [resolvable:$true] %s231
          %238 = sst [smem:[#allocation10]] 2048
          %s239 = scalar_lea.smem [#allocation10], 1
          %240 = sst [smem:[%s239]] 1024
          %s241 = scalar_lea.smem [#allocation10], 2
          %242 = sst [smem:[%s241]] 8
          %s243 = scalar_lea.smem [#allocation10], 3
          %244 = sst [smem:[%s243]] 128
          %s245 = scalar_lea.smem [#allocation10], 4
          %246 = sst [smem:[%s245]] 128
          %s247 = scalar_lea.smem [#allocation10], 5
          %248 = sst [smem:[%s247]] 8
          %250 = dma.general %s218, 2048, %s232, %s209, [#allocation9], [#allocation10], %s230, 0
        $region36: #{tpu_custom_call.1} parent=31 // pred_fallthru
          _
      $region32: #{tpu_custom_call.1} parent=5 // pred_fallthru
        _
      %p251 = scmp.le.s32.totalorder 1, %s18
      %p252 = scmp.lt.s32.totalorder %s18, 3
      %p253 = pnand %p251, %p252
      %p254 = pneg %p253
      // Predicated region
      $region37: #{tpu_custom_call.1} parent=5 // pred_check
        _
      $region38: #{tpu_custom_call.1} parent=5 // pred_check_branch
        %256 = sbr.rel (%p253) target = $region40
      $region39: #{tpu_custom_call.1} parent=5 // pred_region
        %s257 = ssub.s32 %s18, 1
        %s258 = sand.u32 %s31, 1
        %s259 = scalar_lea.sflag [#allocation3], %s258
        %s260 = sand.u32 %s31, 1
        %s261 = smul.addr %s260, 128
        %s262 = scalar_lea.vmem [#allocation2], %s261
        // Predicated region
        $region41: #{tpu_custom_call.1} parent=39 // pred_check
          %p263 = pneg %p44
        $region42: #{tpu_custom_call.1} parent=39 // pred_check_branch
          %265 = sbr.rel (%p263) target = $region44
        $region43: #{tpu_custom_call.1} parent=39 // pred_region
          %266 = dma.done %s259, 2048
        $region44: #{tpu_custom_call.1} parent=39 // pred_fallthru
          _
        // Predicated region
        $region45: #{tpu_custom_call.1} parent=39 // pred_check
          %p267 = pneg %p65
        $region46: #{tpu_custom_call.1} parent=39 // pred_check_branch
          %269 = sbr.rel (%p267) target = $region48
        $region47: #{tpu_custom_call.1} parent=39 // pred_region
          %270 = dma.done [#allocation6], 1024
        $region48: #{tpu_custom_call.1} parent=39 // pred_fallthru
          _
        // Predicated region
        $region49: #{tpu_custom_call.1} parent=39 // pred_check
          %p271 = pneg %p107
        $region50: #{tpu_custom_call.1} parent=39 // pred_check_branch
          %273 = sbr.rel (%p271) target = $region52
        $region51: #{tpu_custom_call.1} parent=39 // pred_region
          %274 = dma.done [#allocation6], 1024
        $region52: #{tpu_custom_call.1} parent=39 // pred_fallthru
          _
        %s275 = sand.u32 %s31, 1
        %s276 = scalar_lea.sflag [#allocation3], %s275
        %s277 = sand.u32 %s31, 1
        %s278 = smul.addr %s277, 128
        %s279 = scalar_lea.vmem [#allocation2], %s278
        %p280 = pneg %p44
        %p281 = pneg %p41
        %p282 = pneg %p65
        %p283 = pneg %p62
        %p284 = pneg %p86
        %p285 = pneg %p83
        %p286 = pneg %p107
        %p287 = pneg %p104
        %p288 = pneg %p128
        %p289 = pneg %p125
        %p290 = pneg %p154
        %p291 = pneg %p151
        %s292 = sand.u32 %s141, 1
        %s293 = scalar_lea.sflag [#allocation4], %s292
        %s294 = sand.u32 %s141, 1
        %s295 = smul.addr %s294, 128
        %s296 = scalar_lea.vmem [#allocation8], %s295
        %s297 = smul.u32 8, %s23
        %s298 = smul.u32 8, %s23
        %v300 = vld [vmem:[#allocation5] sm:$0xf]
        %v301 = vld [vmem:[#allocation5 + $0x4] sm:$0xf]
        %v302 = vld [vmem:[#allocation5 + $0x8] sm:$0xf]
        %v303 = vld [vmem:[#allocation5 + $0xc] sm:$0xf]
        %v304 = vld [vmem:[#allocation5 + $0x10] sm:$0xf]
        %v305 = vld [vmem:[#allocation5 + $0x14] sm:$0xf]
        %v306 = vld [vmem:[#allocation5 + $0x18] sm:$0xf]
        %v307 = vld [vmem:[#allocation5 + $0x1c] sm:$0xf]
        %v308 = vld [vmem:[#allocation5 + $0x20] sm:$0xf]
        %v309 = vld [vmem:[#allocation5 + $0x24] sm:$0xf]
        %v310 = vld [vmem:[#allocation5 + $0x28] sm:$0xf]
        %v311 = vld [vmem:[#allocation5 + $0x2c] sm:$0xf]
        %v312 = vld [vmem:[#allocation5 + $0x30] sm:$0xf]
        %v313 = vld [vmem:[#allocation5 + $0x34] sm:$0xf]
        %v314 = vld [vmem:[#allocation5 + $0x38] sm:$0xf]
        %v315 = vld [vmem:[#allocation5 + $0x3c] sm:$0xf]
        %v316 = vld [vmem:[#allocation7] sm:$0xf]
        %v317 = vld [vmem:[#allocation7 + $0x4] sm:$0xf]
        %v318 = vld [vmem:[#allocation7 + $0x8] sm:$0xf]
        %v319 = vld [vmem:[#allocation7 + $0xc] sm:$0xf]
        %v320 = vld [vmem:[#allocation7 + $0x10] sm:$0xf]
        %v321 = vld [vmem:[#allocation7 + $0x14] sm:$0xf]
        %v322 = vld [vmem:[#allocation7 + $0x18] sm:$0xf]
        %v323 = vld [vmem:[#allocation7 + $0x1c] sm:$0xf]
        %v324 = vld [vmem:[#allocation7 + $0x20] sm:$0xf]
        %v325 = vld [vmem:[#allocation7 + $0x24] sm:$0xf]
        %v326 = vld [vmem:[#allocation7 + $0x28] sm:$0xf]
        %v327 = vld [vmem:[#allocation7 + $0x2c] sm:$0xf]
        %v328 = vld [vmem:[#allocation7 + $0x30] sm:$0xf]
        %v329 = vld [vmem:[#allocation7 + $0x34] sm:$0xf]
        %v330 = vld [vmem:[#allocation7 + $0x38] sm:$0xf]
        %v331 = vld [vmem:[#allocation7 + $0x3c] sm:$0xf]
        %v332 = vld [vmem:[%s2] sm:$0x1]
        %v333 = vld [vmem:[%s4] sm:$0x1]
        %v334 = vld [vmem:[%s262] sm:$0xff]
        %v335 = vld [vmem:[%s262 + $0x8] sm:$0xff]
        %v336 = vld [vmem:[%s262 + $0x10] sm:$0xff]
        %v337 = vld [vmem:[%s262 + $0x18] sm:$0xff]
        %v338 = vld [vmem:[%s262 + $0x20] sm:$0xff]
        %v339 = vld [vmem:[%s262 + $0x28] sm:$0xff]
        %v340 = vld [vmem:[%s262 + $0x30] sm:$0xff]
        %v341 = vld [vmem:[%s262 + $0x38] sm:$0xff]
        %v342 = vmul.f32 %v334, 0.5
        %v343 = vmul.f32 %v335, 0.5
        %v344 = vmul.f32 %v336, 0.5
        %v345 = vmul.f32 %v337, 0.5
        %v346 = vmul.f32 %v338, 0.5
        %v347 = vmul.f32 %v339, 0.5
        %v348 = vmul.f32 %v340, 0.5
        %v349 = vmul.f32 %v341, 0.5
        %v350 = vadd.f32 %v342, 0.0
        %v351 = vadd.f32 %v343, 0.0
        %v352 = vadd.f32 %v344, 0.0
        %v353 = vadd.f32 %v345, 0.0
        %v354 = vadd.f32 %v346, 0.0
        %v355 = vadd.f32 %v347, 0.0
        %v356 = vadd.f32 %v348, 0.0
        %v357 = vadd.f32 %v349, 0.0
        %vm358 = vcmp.ge.f32.partialorder %v350, 1.0
        %vm359 = vcmp.ge.f32.partialorder %v351, 1.0
        %vm360 = vcmp.ge.f32.partialorder %v352, 1.0
        %vm361 = vcmp.ge.f32.partialorder %v353, 1.0
        %vm362 = vcmp.ge.f32.partialorder %v354, 1.0
        %vm363 = vcmp.ge.f32.partialorder %v355, 1.0
        %vm364 = vcmp.ge.f32.partialorder %v356, 1.0
        %vm365 = vcmp.ge.f32.partialorder %v357, 1.0
        %v366 = vsel %vm358, 0.0, %v350
        %v367 = vsel %vm359, 0.0, %v351
        %v368 = vsel %vm360, 0.0, %v352
        %v369 = vsel %vm361, 0.0, %v353
        %v370 = vsel %vm362, 0.0, %v354
        %v371 = vsel %vm363, 0.0, %v355
        %v372 = vsel %vm364, 0.0, %v356
        %v373 = vsel %vm365, 0.0, %v357
        %v374 = vsel %vm358, 1, 0
        %v375 = vsel %vm359, 1, 0
        %v376 = vsel %vm360, 1, 0
        %v377 = vsel %vm361, 1, 0
        %v378 = vsel %vm362, 1, 0
        %v379 = vsel %vm363, 1, 0
        %v380 = vsel %vm364, 1, 0
        %v381 = vsel %vm365, 1, 0
        %v382 = vcvt.s32.f32 %v374
        %v383 = vcvt.s32.f32 %v375
        %v384 = vcvt.s32.f32 %v376
        %v385 = vcvt.s32.f32 %v377
        %v386 = vcvt.s32.f32 %v378
        %v387 = vcvt.s32.f32 %v379
        %v388 = vcvt.s32.f32 %v380
        %v389 = vcvt.s32.f32 %v381
        %v390 = vpack.c.bf16 %v383, %v382
        %v391 = vpack.c.bf16 %v385, %v384
        %v392 = vpack.c.bf16 %v387, %v386
        %v393 = vpack.c.bf16 %v389, %v388
        %v395 = vlaneseq
        %v396 = vshrl.u32 %v395, 7
        %v397 = vsub.s32 0, %v396
        %v398 = vrot.slane %v332, %v397
        %v416 = vunpack.c.l.b16 %v300
        %v417 = vunpack.c.l.b16 %v301
        %v418 = vunpack.c.l.b16 %v302
        %v419 = vunpack.c.l.b16 %v303
        %v420 = vunpack.c.l.b16 %v304
        %v421 = vunpack.c.l.b16 %v305
        %v422 = vunpack.c.l.b16 %v306
        %v423 = vunpack.c.l.b16 %v307
        %v424 = vunpack.c.l.b16 %v308
        %v425 = vunpack.c.l.b16 %v309
        %v426 = vunpack.c.l.b16 %v310
        %v427 = vunpack.c.l.b16 %v311
        %v428 = vunpack.c.l.b16 %v312
        %v429 = vunpack.c.l.b16 %v313
        %v430 = vunpack.c.l.b16 %v314
        %v431 = vunpack.c.l.b16 %v315
        %v432 = vpack.c.b16 %v417, %v416
        %v433 = vpack.c.b16 %v419, %v418
        %v434 = vpack.c.b16 %v421, %v420
        %v435 = vpack.c.b16 %v423, %v422
        %v436 = vpack.c.b16 %v425, %v424
        %v437 = vpack.c.b16 %v427, %v426
        %v438 = vpack.c.b16 %v429, %v428
        %v439 = vpack.c.b16 %v431, %v430
        %448 = vmatprep.subr.bf16.mxu0 0
        %449 = vmatpush1.bf16.msra.mxu0 %v432
        %450 = vmatprep.subr.bf16.mxu0 0
        %451 = vmatpush1.bf16.msra.mxu0 %v433
        %452 = vmatprep.subr.bf16.mxu0 0
        %453 = vmatpush1.bf16.msra.mxu0 %v434
        %454 = vmatprep.subr.bf16.mxu0 0
        %455 = vmatpush1.bf16.msra.mxu0 %v435
        %456 = vmatprep.subr.bf16.mxu0 0
        %457 = vmatpush1.bf16.msra.mxu0 %v436
        %458 = vmatprep.subr.bf16.mxu0 0
        %459 = vmatpush1.bf16.msra.mxu0 %v437
        %460 = vmatprep.subr.bf16.mxu0 0
        %461 = vmatpush1.bf16.msra.mxu0 %v438
        %462 = vmatprep.subr.bf16.mxu0 0
        %463 = vmatpush1.bf16.msra.mxu0 %v439
        %464 = vmatprep.subr.bf16.mxu0 0
        %465 = vmatpush1.bf16.msra.mxu0 0
        %466 = vmatprep.subr.bf16.mxu0 0
        %467 = vmatpush1.bf16.msra.mxu0 0
        %468 = vmatprep.subr.bf16.mxu0 0
        %469 = vmatpush1.bf16.msra.mxu0 0
        %470 = vmatprep.subr.bf16.mxu0 0
        %471 = vmatpush1.bf16.msra.mxu0 0
        %472 = vmatprep.subr.bf16.mxu0 0
        %473 = vmatpush1.bf16.msra.mxu0 0
        %474 = vmatprep.subr.bf16.mxu0 0
        %475 = vmatpush1.bf16.msra.mxu0 0
        %476 = vmatprep.subr.bf16.mxu0 0
        %477 = vmatpush1.bf16.msra.mxu0 0
        %478 = vmatprep.subr.bf16.mxu0 0
        %479 = vmatpush1.bf16.msra.mxu0 0
        %480 = vmatprep.mubr.bf16.mxu0 0
        %481 = vmatmul.mubr.bf16.gmra.mrb[0].mxu0 %v390
        %v482 = vpop.f32.mrb[0].mxu0
        %v483 = vadd.f32 %v398, %v482
        %v484 = vpop.f32.mrb[0].mxu0
        %v485 = vpop.f32.mrb[0].mxu0
        %v486 = vadd.f32 %v398, %v485
        %v487 = vpop.f32.mrb[0].mxu0
        %488 = vmatprep.mubr.bf16.mxu0 0
        %489 = vmatmul.mubr.bf16.gmra.mrb[0].mxu0 %v391
        %v490 = vpop.f32.mrb[0].mxu0
        %v491 = vadd.f32 %v398, %v490
        %v492 = vpop.f32.mrb[0].mxu0
        %v493 = vpop.f32.mrb[0].mxu0
        %v494 = vadd.f32 %v398, %v493
        %v495 = vpop.f32.mrb[0].mxu0
        %496 = vmatprep.mubr.bf16.mxu0 0
        %497 = vmatmul.mubr.bf16.gmra.mrb[0].mxu0 %v392
        %v498 = vpop.f32.mrb[0].mxu0
        %v499 = vadd.f32 %v398, %v498
        %v500 = vpop.f32.mrb[0].mxu0
        %v501 = vpop.f32.mrb[0].mxu0
        %v502 = vadd.f32 %v398, %v501
        %v503 = vpop.f32.mrb[0].mxu0
        %504 = vmatprep.mubr.bf16.mxu0 0
        %505 = vmatmul.mubr.bf16.gmra.mrb[0].mxu0 %v393
        %v506 = vpop.f32.mrb[0].mxu0
        %v507 = vadd.f32 %v398, %v506
        %v508 = vpop.f32.mrb[0].mxu0
        %v509 = vpop.f32.mrb[0].mxu0
        %v510 = vadd.f32 %v398, %v509
        %v511 = vpop.f32.mrb[0].mxu0
        %512 = vdwg.mxu0
        %v513 = vmul.f32 %v483, 0.5
        %v514 = vmul.f32 %v486, 0.5
        %v515 = vmul.f32 %v491, 0.5
        %v516 = vmul.f32 %v494, 0.5
        %v517 = vmul.f32 %v499, 0.5
        %v518 = vmul.f32 %v502, 0.5
        %v519 = vmul.f32 %v507, 0.5
        %v520 = vmul.f32 %v510, 0.5
        %v521 = vadd.f32 %v513, 0.0
        %v522 = vadd.f32 %v514, 0.0
        %v523 = vadd.f32 %v515, 0.0
        %v524 = vadd.f32 %v516, 0.0
        %v525 = vadd.f32 %v517, 0.0
        %v526 = vadd.f32 %v518, 0.0
        %v527 = vadd.f32 %v519, 0.0
        %v528 = vadd.f32 %v520, 0.0
        %vm529 = vcmp.ge.f32.partialorder %v521, 1.0
        %vm530 = vcmp.ge.f32.partialorder %v522, 1.0
        %vm531 = vcmp.ge.f32.partialorder %v523, 1.0
        %vm532 = vcmp.ge.f32.partialorder %v524, 1.0
        %vm533 = vcmp.ge.f32.partialorder %v525, 1.0
        %vm534 = vcmp.ge.f32.partialorder %v526, 1.0
        %vm535 = vcmp.ge.f32.partialorder %v527, 1.0
        %vm536 = vcmp.ge.f32.partialorder %v528, 1.0
        %v537 = vsel %vm529, 0.0, %v521
        %v538 = vsel %vm530, 0.0, %v522
        %v539 = vsel %vm531, 0.0, %v523
        %v540 = vsel %vm532, 0.0, %v524
        %v541 = vsel %vm533, 0.0, %v525
        %v542 = vsel %vm534, 0.0, %v526
        %v543 = vsel %vm535, 0.0, %v527
        %v544 = vsel %vm536, 0.0, %v528
        %v545 = vsel %vm529, 1, 0
        %v546 = vsel %vm530, 1, 0
        %v547 = vsel %vm531, 1, 0
        %v548 = vsel %vm532, 1, 0
        %v549 = vsel %vm533, 1, 0
        %v550 = vsel %vm534, 1, 0
        %v551 = vsel %vm535, 1, 0
        %v552 = vsel %vm536, 1, 0
        %v553 = vcvt.s32.f32 %v545
        %v554 = vcvt.s32.f32 %v546
        %v555 = vcvt.s32.f32 %v547
        %v556 = vcvt.s32.f32 %v548
        %v557 = vcvt.s32.f32 %v549
        %v558 = vcvt.s32.f32 %v550
        %v559 = vcvt.s32.f32 %v551
        %v560 = vcvt.s32.f32 %v552
        %v561 = vpack.c.bf16 %v554, %v553
        %v562 = vpack.c.bf16 %v556, %v555
        %v563 = vpack.c.bf16 %v558, %v557
        %v564 = vpack.c.bf16 %v560, %v559
        %v566 = vlaneseq
        %v567 = vshrl.u32 %v566, 7
        %v568 = vsub.s32 0, %v567
        %v569 = vrot.slane %v333, %v568
        %v587 = vunpack.c.l.b16 %v316
        %v588 = vunpack.c.l.b16 %v317
        %v589 = vunpack.c.l.b16 %v318
        %v590 = vunpack.c.l.b16 %v319
        %v591 = vunpack.c.l.b16 %v320
        %v592 = vunpack.c.l.b16 %v321
        %v593 = vunpack.c.l.b16 %v322
        %v594 = vunpack.c.l.b16 %v323
        %v595 = vunpack.c.l.b16 %v324
        %v596 = vunpack.c.l.b16 %v325
        %v597 = vunpack.c.l.b16 %v326
        %v598 = vunpack.c.l.b16 %v327
        %v599 = vunpack.c.l.b16 %v328
        %v600 = vunpack.c.l.b16 %v329
        %v601 = vunpack.c.l.b16 %v330
        %v602 = vunpack.c.l.b16 %v331
        %v603 = vpack.c.b16 %v588, %v587
        %v604 = vpack.c.b16 %v590, %v589
        %v605 = vpack.c.b16 %v592, %v591
        %v606 = vpack.c.b16 %v594, %v593
        %v607 = vpack.c.b16 %v596, %v595
        %v608 = vpack.c.b16 %v598, %v597
        %v609 = vpack.c.b16 %v600, %v599
        %v610 = vpack.c.b16 %v602, %v601
        %619 = vmatprep.subr.bf16.mxu0 0
        %620 = vmatpush1.bf16.msra.mxu0 %v603
        %621 = vmatprep.subr.bf16.mxu0 0
        %622 = vmatpush1.bf16.msra.mxu0 %v604
        %623 = vmatprep.subr.bf16.mxu0 0
        %624 = vmatpush1.bf16.msra.mxu0 %v605
        %625 = vmatprep.subr.bf16.mxu0 0
        %626 = vmatpush1.bf16.msra.mxu0 %v606
        %627 = vmatprep.subr.bf16.mxu0 0
        %628 = vmatpush1.bf16.msra.mxu0 %v607
        %629 = vmatprep.subr.bf16.mxu0 0
        %630 = vmatpush1.bf16.msra.mxu0 %v608
        %631 = vmatprep.subr.bf16.mxu0 0
        %632 = vmatpush1.bf16.msra.mxu0 %v609
        %633 = vmatprep.subr.bf16.mxu0 0
        %634 = vmatpush1.bf16.msra.mxu0 %v610
        %635 = vmatprep.subr.bf16.mxu0 0
        %636 = vmatpush1.bf16.msra.mxu0 0
        %637 = vmatprep.subr.bf16.mxu0 0
        %638 = vmatpush1.bf16.msra.mxu0 0
        %639 = vmatprep.subr.bf16.mxu0 0
        %640 = vmatpush1.bf16.msra.mxu0 0
        %641 = vmatprep.subr.bf16.mxu0 0
        %642 = vmatpush1.bf16.msra.mxu0 0
        %643 = vmatprep.subr.bf16.mxu0 0
        %644 = vmatpush1.bf16.msra.mxu0 0
        %645 = vmatprep.subr.bf16.mxu0 0
        %646 = vmatpush1.bf16.msra.mxu0 0
        %647 = vmatprep.subr.bf16.mxu0 0
        %648 = vmatpush1.bf16.msra.mxu0 0
        %649 = vmatprep.subr.bf16.mxu0 0
        %650 = vmatpush1.bf16.msra.mxu0 0
        %651 = vmatprep.mubr.bf16.mxu0 0
        %652 = vmatmul.mubr.bf16.gmra.mrb[0].mxu0 %v561
        %v653 = vpop.f32.mrb[0].mxu0
        %v654 = vadd.f32 %v569, %v653
        %v655 = vpop.f32.mrb[0].mxu0
        %v656 = vpop.f32.mrb[0].mxu0
        %v657 = vadd.f32 %v569, %v656
        %v658 = vpop.f32.mrb[0].mxu0
        %659 = vmatprep.mubr.bf16.mxu0 0
        %660 = vmatmul.mubr.bf16.gmra.mrb[0].mxu0 %v562
        %v661 = vpop.f32.mrb[0].mxu0
        %v662 = vadd.f32 %v569, %v661
        %v663 = vpop.f32.mrb[0].mxu0
        %v664 = vpop.f32.mrb[0].mxu0
        %v665 = vadd.f32 %v569, %v664
        %v666 = vpop.f32.mrb[0].mxu0
        %667 = vmatprep.mubr.bf16.mxu0 0
        %668 = vmatmul.mubr.bf16.gmra.mrb[0].mxu0 %v563
        %v669 = vpop.f32.mrb[0].mxu0
        %v670 = vadd.f32 %v569, %v669
        %v671 = vpop.f32.mrb[0].mxu0
        %v672 = vpop.f32.mrb[0].mxu0
        %v673 = vadd.f32 %v569, %v672
        %v674 = vpop.f32.mrb[0].mxu0
        %675 = vmatprep.mubr.bf16.mxu0 0
        %676 = vmatmul.mubr.bf16.gmra.mrb[0].mxu0 %v564
        %v677 = vpop.f32.mrb[0].mxu0
        %v678 = vadd.f32 %v569, %v677
        %v679 = vpop.f32.mrb[0].mxu0
        %v680 = vpop.f32.mrb[0].mxu0
        %v681 = vadd.f32 %v569, %v680
        %v682 = vpop.f32.mrb[0].mxu0
        %683 = vdwg.mxu0
        %684 = vst [vmem:[%s296] sm:$0xff] %v654
        %685 = vst [vmem:[%s296 + $0x8] sm:$0xff] %v657
        %686 = vst [vmem:[%s296 + $0x10] sm:$0xff] %v662
        %687 = vst [vmem:[%s296 + $0x18] sm:$0xff] %v665
        %688 = vst [vmem:[%s296 + $0x20] sm:$0xff] %v670
        %689 = vst [vmem:[%s296 + $0x28] sm:$0xff] %v673
        %690 = vst [vmem:[%s296 + $0x30] sm:$0xff] %v678
        %691 = vst [vmem:[%s296 + $0x38] sm:$0xff] %v681
        %s692 = scalar_lea.vmem %s262, 64 [#allocation2]
        %v693 = vld [vmem:[%s692] sm:$0xff]
        %v694 = vld [vmem:[%s692 + $0x8] sm:$0xff]
        %v695 = vld [vmem:[%s692 + $0x10] sm:$0xff]
        %v696 = vld [vmem:[%s692 + $0x18] sm:$0xff]
        %v697 = vld [vmem:[%s692 + $0x20] sm:$0xff]
        %v698 = vld [vmem:[%s692 + $0x28] sm:$0xff]
        %v699 = vld [vmem:[%s692 + $0x30] sm:$0xff]
        %v700 = vld [vmem:[%s692 + $0x38] sm:$0xff]
        %v701 = vsub.f32 %v693, %v366
        %v702 = vsub.f32 %v694, %v367
        %v703 = vsub.f32 %v695, %v368
        %v704 = vsub.f32 %v696, %v369
        %v705 = vsub.f32 %v697, %v370
        %v706 = vsub.f32 %v698, %v371
        %v707 = vsub.f32 %v699, %v372
        %v708 = vsub.f32 %v700, %v373
        %v709 = vmul.f32 %v701, 0.5
        %v710 = vmul.f32 %v702, 0.5
        %v711 = vmul.f32 %v703, 0.5
        %v712 = vmul.f32 %v704, 0.5
        %v713 = vmul.f32 %v705, 0.5
        %v714 = vmul.f32 %v706, 0.5
        %v715 = vmul.f32 %v707, 0.5
        %v716 = vmul.f32 %v708, 0.5
        %v717 = vadd.f32 %v366, %v709
        %v718 = vadd.f32 %v367, %v710
        %v719 = vadd.f32 %v368, %v711
        %v720 = vadd.f32 %v369, %v712
        %v721 = vadd.f32 %v370, %v713
        %v722 = vadd.f32 %v371, %v714
        %v723 = vadd.f32 %v372, %v715
        %v724 = vadd.f32 %v373, %v716
        %vm725 = vcmp.ge.f32.partialorder %v717, 1.0
        %vm726 = vcmp.ge.f32.partialorder %v718, 1.0
        %vm727 = vcmp.ge.f32.partialorder %v719, 1.0
        %vm728 = vcmp.ge.f32.partialorder %v720, 1.0
        %vm729 = vcmp.ge.f32.partialorder %v721, 1.0
        %vm730 = vcmp.ge.f32.partialorder %v722, 1.0
        %vm731 = vcmp.ge.f32.partialorder %v723, 1.0
        %vm732 = vcmp.ge.f32.partialorder %v724, 1.0
        %v733 = vsel %vm725, 1, 0
        %v734 = vsel %vm726, 1, 0
        %v735 = vsel %vm727, 1, 0
        %v736 = vsel %vm728, 1, 0
        %v737 = vsel %vm729, 1, 0
        %v738 = vsel %vm730, 1, 0
        %v739 = vsel %vm731, 1, 0
        %v740 = vsel %vm732, 1, 0
        %v741 = vcvt.s32.f32 %v733
        %v742 = vcvt.s32.f32 %v734
        %v743 = vcvt.s32.f32 %v735
        %v744 = vcvt.s32.f32 %v736
        %v745 = vcvt.s32.f32 %v737
        %v746 = vcvt.s32.f32 %v738
        %v747 = vcvt.s32.f32 %v739
        %v748 = vcvt.s32.f32 %v740
        %v749 = vpack.c.bf16 %v742, %v741
        %v750 = vpack.c.bf16 %v744, %v743
        %v751 = vpack.c.bf16 %v746, %v745
        %v752 = vpack.c.bf16 %v748, %v747
        %753 = vmatprep.subr.bf16.mxu0 0
        %754 = vmatpush1.bf16.msra.mxu0 %v432
        %755 = vmatprep.subr.bf16.mxu0 0
        %756 = vmatpush1.bf16.msra.mxu0 %v433
        %757 = vmatprep.subr.bf16.mxu0 0
        %758 = vmatpush1.bf16.msra.mxu0 %v434
        %759 = vmatprep.subr.bf16.mxu0 0
        %760 = vmatpush1.bf16.msra.mxu0 %v435
        %761 = vmatprep.subr.bf16.mxu0 0
        %762 = vmatpush1.bf16.msra.mxu0 %v436
        %763 = vmatprep.subr.bf16.mxu0 0
        %764 = vmatpush1.bf16.msra.mxu0 %v437
        %765 = vmatprep.subr.bf16.mxu0 0
        %766 = vmatpush1.bf16.msra.mxu0 %v438
        %767 = vmatprep.subr.bf16.mxu0 0
        %768 = vmatpush1.bf16.msra.mxu0 %v439
        %769 = vmatprep.subr.bf16.mxu0 0
        %770 = vmatpush1.bf16.msra.mxu0 0
        %771 = vmatprep.subr.bf16.mxu0 0
        %772 = vmatpush1.bf16.msra.mxu0 0
        %773 = vmatprep.subr.bf16.mxu0 0
        %774 = vmatpush1.bf16.msra.mxu0 0
        %775 = vmatprep.subr.bf16.mxu0 0
        %776 = vmatpush1.bf16.msra.mxu0 0
        %777 = vmatprep.subr.bf16.mxu0 0
        %778 = vmatpush1.bf16.msra.mxu0 0
        %779 = vmatprep.subr.bf16.mxu0 0
        %780 = vmatpush1.bf16.msra.mxu0 0
        %781 = vmatprep.subr.bf16.mxu0 0
        %782 = vmatpush1.bf16.msra.mxu0 0
        %783 = vmatprep.subr.bf16.mxu0 0
        %784 = vmatpush1.bf16.msra.mxu0 0
        %785 = vmatprep.mubr.bf16.mxu0 0
        %786 = vmatmul.mubr.bf16.gmra.mrb[0].mxu0 %v749
        %v787 = vpop.f32.mrb[0].mxu0
        %v788 = vadd.f32 %v398, %v787
        %v789 = vpop.f32.mrb[0].mxu0
        %v790 = vpop.f32.mrb[0].mxu0
        %v791 = vadd.f32 %v398, %v790
        %v792 = vpop.f32.mrb[0].mxu0
        %793 = vmatprep.mubr.bf16.mxu0 0
        %794 = vmatmul.mubr.bf16.gmra.mrb[0].mxu0 %v750
        %v795 = vpop.f32.mrb[0].mxu0
        %v796 = vadd.f32 %v398, %v795
        %v797 = vpop.f32.mrb[0].mxu0
        %v798 = vpop.f32.mrb[0].mxu0
        %v799 = vadd.f32 %v398, %v798
        %v800 = vpop.f32.mrb[0].mxu0
        %801 = vmatprep.mubr.bf16.mxu0 0
        %802 = vmatmul.mubr.bf16.gmra.mrb[0].mxu0 %v751
        %v803 = vpop.f32.mrb[0].mxu0
        %v804 = vadd.f32 %v398, %v803
        %v805 = vpop.f32.mrb[0].mxu0
        %v806 = vpop.f32.mrb[0].mxu0
        %v807 = vadd.f32 %v398, %v806
        %v808 = vpop.f32.mrb[0].mxu0
        %809 = vmatprep.mubr.bf16.mxu0 0
        %810 = vmatmul.mubr.bf16.gmra.mrb[0].mxu0 %v752
        %v811 = vpop.f32.mrb[0].mxu0
        %v812 = vadd.f32 %v398, %v811
        %v813 = vpop.f32.mrb[0].mxu0
        %v814 = vpop.f32.mrb[0].mxu0
        %v815 = vadd.f32 %v398, %v814
        %v816 = vpop.f32.mrb[0].mxu0
        %817 = vdwg.mxu0
        %v818 = vsub.f32 %v788, %v537
        %v819 = vsub.f32 %v791, %v538
        %v820 = vsub.f32 %v796, %v539
        %v821 = vsub.f32 %v799, %v540
        %v822 = vsub.f32 %v804, %v541
        %v823 = vsub.f32 %v807, %v542
        %v824 = vsub.f32 %v812, %v543
        %v825 = vsub.f32 %v815, %v544
        %v826 = vmul.f32 %v818, 0.5
        %v827 = vmul.f32 %v819, 0.5
        %v828 = vmul.f32 %v820, 0.5
        %v829 = vmul.f32 %v821, 0.5
        %v830 = vmul.f32 %v822, 0.5
        %v831 = vmul.f32 %v823, 0.5
        %v832 = vmul.f32 %v824, 0.5
        %v833 = vmul.f32 %v825, 0.5
        %v834 = vadd.f32 %v537, %v826
        %v835 = vadd.f32 %v538, %v827
        %v836 = vadd.f32 %v539, %v828
        %v837 = vadd.f32 %v540, %v829
        %v838 = vadd.f32 %v541, %v830
        %v839 = vadd.f32 %v542, %v831
        %v840 = vadd.f32 %v543, %v832
        %v841 = vadd.f32 %v544, %v833
        %vm842 = vcmp.ge.f32.partialorder %v834, 1.0
        %vm843 = vcmp.ge.f32.partialorder %v835, 1.0
        %vm844 = vcmp.ge.f32.partialorder %v836, 1.0
        %vm845 = vcmp.ge.f32.partialorder %v837, 1.0
        %vm846 = vcmp.ge.f32.partialorder %v838, 1.0
        %vm847 = vcmp.ge.f32.partialorder %v839, 1.0
        %vm848 = vcmp.ge.f32.partialorder %v840, 1.0
        %vm849 = vcmp.ge.f32.partialorder %v841, 1.0
        %v850 = vsel %vm842, 1, 0
        %v851 = vsel %vm843, 1, 0
        %v852 = vsel %vm844, 1, 0
        %v853 = vsel %vm845, 1, 0
        %v854 = vsel %vm846, 1, 0
        %v855 = vsel %vm847, 1, 0
        %v856 = vsel %vm848, 1, 0
        %v857 = vsel %vm849, 1, 0
        %v858 = vcvt.s32.f32 %v850
        %v859 = vcvt.s32.f32 %v851
        %v860 = vcvt.s32.f32 %v852
        %v861 = vcvt.s32.f32 %v853
        %v862 = vcvt.s32.f32 %v854
        %v863 = vcvt.s32.f32 %v855
        %v864 = vcvt.s32.f32 %v856
        %v865 = vcvt.s32.f32 %v857
        %v866 = vpack.c.bf16 %v859, %v858
        %v867 = vpack.c.bf16 %v861, %v860
        %v868 = vpack.c.bf16 %v863, %v862
        %v869 = vpack.c.bf16 %v865, %v864
        %870 = vmatprep.subr.bf16.mxu0 0
        %871 = vmatpush1.bf16.msra.mxu0 %v603
        %872 = vmatprep.subr.bf16.mxu0 0
        %873 = vmatpush1.bf16.msra.mxu0 %v604
        %874 = vmatprep.subr.bf16.mxu0 0
        %875 = vmatpush1.bf16.msra.mxu0 %v605
        %876 = vmatprep.subr.bf16.mxu0 0
        %877 = vmatpush1.bf16.msra.mxu0 %v606
        %878 = vmatprep.subr.bf16.mxu0 0
        %879 = vmatpush1.bf16.msra.mxu0 %v607
        %880 = vmatprep.subr.bf16.mxu0 0
        %881 = vmatpush1.bf16.msra.mxu0 %v608
        %882 = vmatprep.subr.bf16.mxu0 0
        %883 = vmatpush1.bf16.msra.mxu0 %v609
        %884 = vmatprep.subr.bf16.mxu0 0
        %885 = vmatpush1.bf16.msra.mxu0 %v610
        %886 = vmatprep.subr.bf16.mxu0 0
        %887 = vmatpush1.bf16.msra.mxu0 0
        %888 = vmatprep.subr.bf16.mxu0 0
        %889 = vmatpush1.bf16.msra.mxu0 0
        %890 = vmatprep.subr.bf16.mxu0 0
        %891 = vmatpush1.bf16.msra.mxu0 0
        %892 = vmatprep.subr.bf16.mxu0 0
        %893 = vmatpush1.bf16.msra.mxu0 0
        %894 = vmatprep.subr.bf16.mxu0 0
        %895 = vmatpush1.bf16.msra.mxu0 0
        %896 = vmatprep.subr.bf16.mxu0 0
        %897 = vmatpush1.bf16.msra.mxu0 0
        %898 = vmatprep.subr.bf16.mxu0 0
        %899 = vmatpush1.bf16.msra.mxu0 0
        %900 = vmatprep.subr.bf16.mxu0 0
        %901 = vmatpush1.bf16.msra.mxu0 0
        %902 = vmatprep.mubr.bf16.mxu0 0
        %903 = vmatmul.mubr.bf16.gmra.mrb[0].mxu0 %v866
        %v904 = vpop.f32.mrb[0].mxu0
        %v905 = vadd.f32 %v569, %v904
        %v906 = vpop.f32.mrb[0].mxu0
        %v907 = vpop.f32.mrb[0].mxu0
        %v908 = vadd.f32 %v569, %v907
        %v909 = vpop.f32.mrb[0].mxu0
        %910 = vmatprep.mubr.bf16.mxu0 0
        %911 = vmatmul.mubr.bf16.gmra.mrb[0].mxu0 %v867
        %v912 = vpop.f32.mrb[0].mxu0
        %v913 = vadd.f32 %v569, %v912
        %v914 = vpop.f32.mrb[0].mxu0
        %v915 = vpop.f32.mrb[0].mxu0
        %v916 = vadd.f32 %v569, %v915
        %v917 = vpop.f32.mrb[0].mxu0
        %918 = vmatprep.mubr.bf16.mxu0 0
        %919 = vmatmul.mubr.bf16.gmra.mrb[0].mxu0 %v868
        %v920 = vpop.f32.mrb[0].mxu0
        %v921 = vadd.f32 %v569, %v920
        %v922 = vpop.f32.mrb[0].mxu0
        %v923 = vpop.f32.mrb[0].mxu0
        %v924 = vadd.f32 %v569, %v923
        %v925 = vpop.f32.mrb[0].mxu0
        %926 = vmatprep.mubr.bf16.mxu0 0
        %927 = vmatmul.mubr.bf16.gmra.mrb[0].mxu0 %v869
        %v928 = vpop.f32.mrb[0].mxu0
        %v929 = vadd.f32 %v569, %v928
        %v930 = vpop.f32.mrb[0].mxu0
        %v931 = vpop.f32.mrb[0].mxu0
        %v932 = vadd.f32 %v569, %v931
        %v933 = vpop.f32.mrb[0].mxu0
        %934 = vdwg.mxu0
        %s935 = scalar_lea.vmem %s296, 64 [#allocation8]
        %936 = vst [vmem:[%s935] sm:$0xff] %v905
        %937 = vst [vmem:[%s935 + $0x8] sm:$0xff] %v908
        %938 = vst [vmem:[%s935 + $0x10] sm:$0xff] %v913
        %939 = vst [vmem:[%s935 + $0x18] sm:$0xff] %v916
        %940 = vst [vmem:[%s935 + $0x20] sm:$0xff] %v921
        %941 = vst [vmem:[%s935 + $0x28] sm:$0xff] %v924
        %942 = vst [vmem:[%s935 + $0x30] sm:$0xff] %v929
        %943 = vst [vmem:[%s935 + $0x38] sm:$0xff] %v932
        %s944 = sand.u32 %s141, 1
        %s945 = scalar_lea.sflag [#allocation4], %s944
        %s946 = sand.u32 %s141, 1
        %s947 = smul.addr %s946, 128
        %s948 = scalar_lea.vmem [#allocation8], %s947
        // Predicated region
        $region53: #{tpu_custom_call.1} parent=39 // pred_check
          %p949 = pneg %p151
        $region54: #{tpu_custom_call.1} parent=39 // pred_check_branch
          %951 = sbr.rel (%p949) target = $region56
        $region55: #{tpu_custom_call.1} parent=39 // pred_region
          #allocation12 [shape = 'u32[6]{0}', space=smem, size = 0x18, scoped, tag = 'DMA stride descriptor']
          %s952 = smul.u32 8, %s23
          %s954 = ssub.s32 2048, 2048
          %955 = vsyncadd %s945, %s954
          %s956 = smul.addr %s952, 128
          %s957 = scalar_lea.hbm %s5, %s956
          %s959 = sshll.u32 1, 14
          %s960 = sxor.u32 4294967295, %s959
          %s963 = sshll.u32 7, 18
          %s964 = sxor.u32 4294967295, %s963
          %s965 = sand.u32 0, %s964
          %s967 = sor.u32 %s965, 0
          %s969 = sshll.u32 3, 24
          %s970 = sxor.u32 4294967295, %s969
          %s971 = sand.u32 %s967, %s970
          %s973 = sor.u32 %s971, 0
          %s974 = sshll.u32 %s948, 4
          %s975 = int_to_ptr.vmem [resolvable:$true] %s974
          %981 = sst [smem:[#allocation12]] 1024
          %s982 = scalar_lea.smem [#allocation12], 1
          %983 = sst [smem:[%s982]] 2048
          %s984 = scalar_lea.smem [#allocation12], 2
          %985 = sst [smem:[%s984]] 8
          %s986 = scalar_lea.smem [#allocation12], 3
          %987 = sst [smem:[%s986]] 128
          %s988 = scalar_lea.smem [#allocation12], 4
          %989 = sst [smem:[%s988]] 128
          %s990 = scalar_lea.smem [#allocation12], 5
          %991 = sst [smem:[%s990]] 8
          %993 = dma.general %s975, 2048, %s957, %s945, [#allocation11], [#allocation12], %s973, 0
        $region56: #{tpu_custom_call.1} parent=39 // pred_fallthru
          _
      $region40: #{tpu_custom_call.1} parent=5 // pred_fallthru
        _
      %p994 = scmp.le.s32.totalorder 2, %s18
      // Predicated region
      $region57: #{tpu_custom_call.1} parent=5 // pred_check
        %p995 = pneg %p994
      $region58: #{tpu_custom_call.1} parent=5 // pred_check_branch
        %997 = sbr.rel (%p995) target = $region60
      $region59: #{tpu_custom_call.1} parent=5 // pred_region
        %s998 = ssub.s32 %s18, 2
        // Predicated region
        $region61: #{tpu_custom_call.1} parent=59 // pred_check
          %p999 = pneg %p157
        $region62: #{tpu_custom_call.1} parent=59 // pred_check_branch
          %1001 = sbr.rel (%p999) target = $region64
        $region63: #{tpu_custom_call.1} parent=59 // pred_region
          %s1002 = sand.u32 %s142, 1
          %s1003 = scalar_lea.sflag [#allocation4], %s1002
          %s1004 = sand.u32 %s142, 1
          %s1005 = smul.addr %s1004, 128
          %s1006 = scalar_lea.vmem [#allocation8], %s1005
          %1007 = dma.done %s1003, 2048
        $region64: #{tpu_custom_call.1} parent=59 // pred_fallthru
          _
      $region60: #{tpu_custom_call.1} parent=5 // pred_fallthru
        _
    $region6: #{tpu_custom_call.1} parent=1 // loop_footer
      %s22 = sadd.s32 1, %s18
    $region7: #{tpu_custom_call.1} parent=1 // loop_footer_branch
      %17 = sbr.rel target = $region3
    $region8: #{tpu_custom_call.1} parent=1 // loop_exit
      _
    %1008 = vsyncpa [#allocation3], 1
    %s1009 = scalar_lea.sflag [#allocation3], 1
    %1010 = vsyncpa %s1009, 1
    %1011 = vsyncpa [#allocation6], 1
    %1012 = vsyncpa [#allocation4], 1
    %s1013 = scalar_lea.sflag [#allocation4], 1
    %1014 = vsyncpa %s1013, 1

</llo_original>
